<compile_context>
chip_gen: v5e
topology: v5e:2x2
jax: 0.10.0
libtpu: 0.0.40
codegen_flags: <defaults>
</compile_context>

<pallas_src>
import functools

import jax
import jax.numpy as jnp
from jax.experimental import pallas as pl
from jax.experimental.pallas import tpu as pltpu

EPS = 1e-5  # torch nn.LayerNorm default


def _layernorm(x, g, b):
    mu = jnp.mean(x, axis=-1, keepdims=True)
    var = jnp.mean((x - mu) ** 2, axis=-1, keepdims=True)
    return (x - mu) * jax.lax.rsqrt(var + EPS) * g + b


def _gelu_tanh(x):
    # nn.GELU(approximate='tanh')
    c = jnp.asarray(jnp.sqrt(2.0 / jnp.pi), dtype=x.dtype)
    return 0.5 * x * (1.0 + jnp.tanh(c * (x + 0.044715 * x * x * x)))


def _full_spec(a):
    """Whole-array block, constant across the grid (any grid rank)."""
    nd = a.ndim
    return pl.BlockSpec(a.shape, lambda *_, _nd=nd: (0,) * _nd)


def _compiler_params(semantics, io_block_bytes, scratch_bytes=0):
    """Explicit scoped-VMEM budget: 2x (double-buffered) I/O blocks + live
    intermediates + headroom, clamped to a range safe on v5e/v6e/v7x."""
    limit = int(2 * io_block_bytes + scratch_bytes) + (4 << 20)
    limit = max(limit, 32 << 20)
    limit = min(limit, 96 << 20)
    return pltpu.CompilerParams(dimension_semantics=semantics,
                                vmem_limit_bytes=limit)


# --------------------------------------------------------------------------------------
# Transformer decoder block: pre-LN attention + pre-LN MLP with residuals, fused per batch
# --------------------------------------------------------------------------------------
def block_kernel(x_ref, ln1w_ref, ln1b_ref, wqkv_ref, bqkv_ref, wo_ref, bo_ref,
                 ln2w_ref, ln2b_ref, wup_ref, bup_ref, wdn_ref, bdn_ref,
                 y_ref, *, n_heads, head_size):
    x = x_ref[0]                              # (T, D)
    T, D = x.shape

    # ---- attention sublayer: x + Wo( softmax(causal(q k^T / sqrt(hs))) v ) ----
    h = _layernorm(x, ln1w_ref[...], ln1b_ref[...])
    qkv = jnp.dot(h, wqkv_ref[...], preferred_element_type=jnp.float32) + bqkv_ref[...]
    q = qkv[:, :D].reshape(T, n_heads, head_size)
    k = qkv[:, D:2 * D].reshape(T, n_heads, head_size)
    v = qkv[:, 2 * D:].reshape(T, n_heads, head_size)

    rows = jax.lax.broadcasted_iota(jnp.int32, (T, T), 0)
    cols = jax.lax.broadcasted_iota(jnp.int32, (T, T), 1)
    causal = rows >= cols
    scale = 1.0 / (head_size ** 0.5)

    # Head-batched attention: one scheduled matmul sequence on the MXU.
    # TODO(synk): for long T, flash-tile over the KV axis (online softmax) instead of
    # materializing the full (H, T, T) score tensor.
    s = jnp.einsum('qhd,khd->hqk', q, k,
                   preferred_element_type=jnp.float32) * scale        # (H, T, T)
    s = jnp.where(causal[None, :, :], s, -1e30)
    s = s - jnp.max(s, axis=-1, keepdims=True)
    p = jnp.exp(s)
    p = p * pl.reciprocal(jnp.sum(p, axis=-1, keepdims=True), approx=True)
    ctx = jnp.einsum('hqk,khd->qhd', p, v,
                     preferred_element_type=jnp.float32).reshape(T, D)  # (T, D)

    attn_out = jnp.dot(ctx, wo_ref[...], preferred_element_type=jnp.float32) + bo_ref[...]
    x1 = x + attn_out

    # ---- MLP sublayer: x1 + Wdn( gelu_tanh( Wup(ln(x1)) ) ) ----
    h2 = _layernorm(x1, ln2w_ref[...], ln2b_ref[...])
    up = jnp.dot(h2, wup_ref[...], preferred_element_type=jnp.float32) + bup_ref[...]
    act = _gelu_tanh(up)
    dn = jnp.dot(act, wdn_ref[...], preferred_element_type=jnp.float32) + bdn_ref[...]

    y_ref[0] = x1 + dn


def run_block(x, p, n_heads):
    B, T, D = x.shape
    head_size = D // n_heads
    weights = (p['ln1_w'], p['ln1_b'], p['w_qkv'], p['b_qkv'], p['w_o'], p['b_o'],
               p['ln2_w'], p['ln2_b'], p['w_up'], p['b_up'], p['w_dn'], p['b_dn'])
    # TODO(synk): for large D, tile w_qkv / w_up / w_dn over their output-N (and K) dims
    # instead of whole-weight blocks so the block kernel fits v7x's 64 MiB VMEM.
    io_bytes = (2 * T * D + sum(int(w.size) for w in weights)) * 4
    scratch_bytes = (T * (3 * D + 4 * D + 2 * D) + n_heads * T * T) * 4
    return pl.pallas_call(
        functools.partial(block_kernel, n_heads=n_heads, head_size=head_size),
        out_shape=jax.ShapeDtypeStruct((B, T, D), x.dtype),
        grid=(B,),
        in_specs=[pl.BlockSpec((1, T, D), lambda b: (b, 0, 0))]
                 + [_full_spec(w) for w in weights],
        out_specs=pl.BlockSpec((1, T, D), lambda b: (b, 0, 0)),
        compiler_params=_compiler_params(("parallel",), io_bytes, scratch_bytes),
    )(x, *weights)


# --------------------------------------------------------------------------------------
# Final LayerNorm + weight-tied LM head, tiled over the vocab dimension
# --------------------------------------------------------------------------------------
def lm_head_kernel(x_ref, g_ref, b_ref, w_ref, out_ref):
    x = x_ref[0]                                                  # (T, D)
    h = _layernorm(x, g_ref[...], b_ref[...])
    # w_ref is a (TILE_V, D) slice of the tied (V, D) token embedding; contract over D
    # directly (== h @ w.T) so no transposed copy of wte is ever materialized.
    out_ref[0] = jax.lax.dot_general(
        h, w_ref[...], (((1,), (1,)), ((), ())),
        preferred_element_type=jnp.float32)


def _pick_vocab_tile(V):
    for t in (2048, 1024, 512, 256, 128):
        if V % t == 0:
            return t
    return V


def run_lm_head(x, lnf_w, lnf_b, wte):
    B, T, D = x.shape
    V = wte.shape[0]
    tile_v = _pick_vocab_tile(V)
    n_vt = V // tile_v
    io_bytes = (T * D + tile_v * D + T * tile_v + 2 * D) * 4
    return pl.pallas_call(
        lm_head_kernel,
        out_shape=jax.ShapeDtypeStruct((B, T, V), x.dtype),
        grid=(B, n_vt),
        in_specs=[pl.BlockSpec((1, T, D), lambda b, j: (b, 0, 0)),
                  _full_spec(lnf_w), _full_spec(lnf_b),
                  pl.BlockSpec((tile_v, D), lambda b, j: (j, 0))],
        out_specs=pl.BlockSpec((1, T, tile_v), lambda b, j: (b, 0, j)),
        compiler_params=_compiler_params(("parallel", "parallel"), io_bytes,
                                         scratch_bytes=T * D * 4),
    )(x, lnf_w, lnf_b, wte)


# --------------------------------------------------------------------------------------
# Parameters + forward
# --------------------------------------------------------------------------------------
def init_params(key, vocab_size, context_size, d_embed, n_layers):
    """GPT-2 style init: normal(0, 0.02); SCALE_INIT layers scaled by (2*n_layers)^-0.5;
    biases zero; layernorm gamma=1 beta=0; LM head tied to token embedding (kept (V,D))."""
    std = 0.02
    scaled_std = 0.02 * (2 * n_layers) ** -0.5
    n_keys = 2 + n_layers * 4
    keys = list(jax.random.split(key, n_keys))
    ki = iter(keys)

    def normal(shape, s):
        return (s * jax.random.normal(next(ki), shape)).astype(jnp.float32)

    params = {
        'wte': normal((vocab_size, d_embed), std),       # token embedding (tied LM head)
        'wpe': normal((context_size, d_embed), std),     # position embedding
        'lnf_w': jnp.ones((1, d_embed), jnp.float32),
        'lnf_b': jnp.zeros((1, d_embed), jnp.float32),
        'blocks': [],
    }
    for _ in range(n_layers):
        blk = {
            'ln1_w': jnp.ones((1, d_embed), jnp.float32),
            'ln1_b': jnp.zeros((1, d_embed), jnp.float32),
            'w_qkv': normal((d_embed, 3 * d_embed), std),
            'b_qkv': jnp.zeros((1, 3 * d_embed), jnp.float32),
            'w_o': normal((d_embed, d_embed), scaled_std),          # SCALE_INIT
            'b_o': jnp.zeros((1, d_embed), jnp.float32),
            'ln2_w': jnp.ones((1, d_embed), jnp.float32),
            'ln2_b': jnp.zeros((1, d_embed), jnp.float32),
            'w_up': normal((d_embed, 4 * d_embed), std),
            'b_up': jnp.zeros((1, 4 * d_embed), jnp.float32),
            'w_dn': normal((4 * d_embed, d_embed), scaled_std),     # SCALE_INIT
            'b_dn': jnp.zeros((1, d_embed), jnp.float32),
        }
        params['blocks'].append(blk)
    return params


def gpt_forward(tokens, params, n_heads):
    """tokens: (B, T) int32. Returns logits (B, T, vocab_size). (loss path omitted:
    targets=None in the reference returns loss=None.)"""
    B, T = tokens.shape
    # Embedding gathers are glue (plain JAX); matmul/attention/LN hot paths run in Pallas.
    tok_emb = jnp.take(params['wte'], tokens, axis=0)          # (B, T, D)
    pos_emb = params['wpe'][:T]                                # (T, D)
    x = tok_emb + pos_emb[None, :, :]
    for blk in params['blocks']:
        x = run_block(x, blk, n_heads)
    logits = run_lm_head(x, params['lnf_w'], params['lnf_b'], params['wte'])
    return logits


if __name__ == "__main__":
    # GPTConfig-equivalent small config
    vocab_size = 256
    context_size = 16
    d_embed = 32
    n_heads = 4
    n_layers = 2
    B, T = 2, 8
    assert T <= context_size

    key = jax.random.PRNGKey(0)
    k_tok, k_par = jax.random.split(key)
    tokens = jax.random.randint(k_tok, (B, T), 0, vocab_size, dtype=jnp.int32)
    params = init_params(k_par, vocab_size, context_size, d_embed, n_layers)

    logits = gpt_forward(tokens, params, n_heads)
    jax.block_until_ready(logits)
    assert logits.shape == (B, T, vocab_size)
    print("KERNEL_OK")
</pallas_src>

<mosaic_0001>
module attributes {stable_mosaic.version = 11 : i64} {
  func.func @block_kernel(%arg0: i32, %arg1: memref<1x8x32xf32, #tpu.memory_space<vmem>>, %arg2: memref<1x32xf32, #tpu.memory_space<vmem>>, %arg3: memref<1x32xf32, #tpu.memory_space<vmem>>, %arg4: memref<32x96xf32, #tpu.memory_space<vmem>>, %arg5: memref<1x96xf32, #tpu.memory_space<vmem>>, %arg6: memref<32x32xf32, #tpu.memory_space<vmem>>, %arg7: memref<1x32xf32, #tpu.memory_space<vmem>>, %arg8: memref<1x32xf32, #tpu.memory_space<vmem>>, %arg9: memref<1x32xf32, #tpu.memory_space<vmem>>, %arg10: memref<32x128xf32, #tpu.memory_space<vmem>>, %arg11: memref<1x128xf32, #tpu.memory_space<vmem>>, %arg12: memref<128x32xf32, #tpu.memory_space<vmem>>, %arg13: memref<1x32xf32, #tpu.memory_space<vmem>>, %arg14: memref<1x8x32xf32, #tpu.memory_space<vmem>>) attributes {dimension_semantics = [#tpu.dimension_semantics<parallel>], iteration_bounds = array<i64: 2>, scalar_prefetch = 0 : i64, scratch_operands = 0 : i64, tpu.core_type = #tpu.core_type<tc>, window_params = [{transform_indices = @transform_0, window_bounds = array<i64: 1, 8, 32>}, {pipeline_mode = #tpu.pipeline_mode<synchronous>, transform_indices = @transform_1, window_bounds = array<i64: 1, 32>}, {pipeline_mode = #tpu.pipeline_mode<synchronous>, transform_indices = @transform_2, window_bounds = array<i64: 1, 32>}, {pipeline_mode = #tpu.pipeline_mode<synchronous>, transform_indices = @transform_3, window_bounds = array<i64: 32, 96>}, {pipeline_mode = #tpu.pipeline_mode<synchronous>, transform_indices = @transform_4, window_bounds = array<i64: 1, 96>}, {pipeline_mode = #tpu.pipeline_mode<synchronous>, transform_indices = @transform_5, window_bounds = array<i64: 32, 32>}, {pipeline_mode = #tpu.pipeline_mode<synchronous>, transform_indices = @transform_6, window_bounds = array<i64: 1, 32>}, {pipeline_mode = #tpu.pipeline_mode<synchronous>, transform_indices = @transform_7, window_bounds = array<i64: 1, 32>}, {pipeline_mode = #tpu.pipeline_mode<synchronous>, transform_indices = @transform_8, window_bounds = array<i64: 1, 32>}, {pipeline_mode = #tpu.pipeline_mode<synchronous>, transform_indices = @transform_9, window_bounds = array<i64: 32, 128>}, {pipeline_mode = #tpu.pipeline_mode<synchronous>, transform_indices = @transform_10, window_bounds = array<i64: 1, 128>}, {pipeline_mode = #tpu.pipeline_mode<synchronous>, transform_indices = @transform_11, window_bounds = array<i64: 128, 32>}, {pipeline_mode = #tpu.pipeline_mode<synchronous>, transform_indices = @transform_12, window_bounds = array<i64: 1, 32>}, {transform_indices = @transform_13, window_bounds = array<i64: 1, 8, 32>}]} {
    %c0 = arith.constant 0 : index
    %c0_0 = arith.constant 0 : index
    %c0_1 = arith.constant 0 : index
    %0 = vector.load %arg1[%c0, %c0_0, %c0_1] : memref<1x8x32xf32, #tpu.memory_space<vmem>>, vector<1x8x32xf32>
    %1 = vector.shape_cast %0 : vector<1x8x32xf32> to vector<8x32xf32>
    %c0_2 = arith.constant 0 : index
    %c0_3 = arith.constant 0 : index
    %2 = vector.load %arg2[%c0_2, %c0_3] : memref<1x32xf32, #tpu.memory_space<vmem>>, vector<1x32xf32>
    %c0_4 = arith.constant 0 : index
    %c0_5 = arith.constant 0 : index
    %3 = vector.load %arg3[%c0_4, %c0_5] : memref<1x32xf32, #tpu.memory_space<vmem>>, vector<1x32xf32>
    %cst = arith.constant dense<0.000000e+00> : vector<8xf32>
    %4 = vector.multi_reduction <add>, %1, %cst [1] : vector<8x32xf32> to vector<8xf32>
    %5 = vector.shape_cast %4 : vector<8xf32> to vector<8x1xf32>
    %cst_6 = arith.constant 3.200000e+01 : f32
    %6 = vector.broadcast %cst_6 : f32 to vector<8x1xf32>
    %7 = arith.divf %5, %6 : vector<8x1xf32>
    %8 = vector.broadcast %7 : vector<8x1xf32> to vector<8x32xf32>
    %9 = arith.subf %1, %8 : vector<8x32xf32>
    %10 = arith.mulf %9, %9 : vector<8x32xf32>
    %cst_7 = arith.constant dense<0.000000e+00> : vector<8xf32>
    %11 = vector.multi_reduction <add>, %10, %cst_7 [1] : vector<8x32xf32> to vector<8xf32>
    %12 = vector.shape_cast %11 : vector<8xf32> to vector<8x1xf32>
    %cst_8 = arith.constant 3.200000e+01 : f32
    %13 = vector.broadcast %cst_8 : f32 to vector<8x1xf32>
    %14 = arith.divf %12, %13 : vector<8x1xf32>
    %15 = vector.broadcast %7 : vector<8x1xf32> to vector<8x32xf32>
    %16 = arith.subf %1, %15 : vector<8x32xf32>
    %cst_9 = arith.constant 9.99999974E-6 : f32
    %17 = vector.broadcast %cst_9 : f32 to vector<8x1xf32>
    %18 = arith.addf %14, %17 : vector<8x1xf32>
    %19 = math.rsqrt %18 : vector<8x1xf32>
    %20 = vector.broadcast %19 : vector<8x1xf32> to vector<8x32xf32>
    %21 = arith.mulf %16, %20 : vector<8x32xf32>
    %22 = vector.broadcast %2 : vector<1x32xf32> to vector<8x32xf32>
    %23 = arith.mulf %21, %22 : vector<8x32xf32>
    %24 = vector.broadcast %3 : vector<1x32xf32> to vector<8x32xf32>
    %25 = arith.addf %23, %24 : vector<8x32xf32>
    %c0_10 = arith.constant 0 : index
    %c0_11 = arith.constant 0 : index
    %26 = vector.load %arg4[%c0_10, %c0_11] : memref<32x96xf32, #tpu.memory_space<vmem>>, vector<32x96xf32>
    %cst_12 = arith.constant dense<0.000000e+00> : vector<8x96xf32>
    %27 = tpu.matmul %25, %26, %cst_12 {dimension_numbers = #tpu.dot_dimension_numbers<[1], [0], [0], [1], [0, 0, 1, 1], [], []>} : vector<8x32xf32>, vector<32x96xf32>, vector<8x96xf32> -> vector<8x96xf32>
    %c0_13 = arith.constant 0 : index
    %c0_14 = arith.constant 0 : index
    %28 = vector.load %arg5[%c0_13, %c0_14] : memref<1x96xf32, #tpu.memory_space<vmem>>, vector<1x96xf32>
    %29 = vector.broadcast %28 : vector<1x96xf32> to vector<8x96xf32>
    %30 = arith.addf %27, %29 : vector<8x96xf32>
    %31 = vector.extract_strided_slice %30 {offsets = [0, 0], sizes = [8, 32], strides = [1, 1]} : vector<8x96xf32> to vector<8x32xf32>
    %32 = vector.shape_cast %31 : vector<8x32xf32> to vector<8x4x8xf32>
    %33 = vector.extract_strided_slice %30 {offsets = [0, 32], sizes = [8, 32], strides = [1, 1]} : vector<8x96xf32> to vector<8x32xf32>
    %34 = vector.shape_cast %33 : vector<8x32xf32> to vector<8x4x8xf32>
    %35 = vector.extract_strided_slice %30 {offsets = [0, 64], sizes = [8, 32], strides = [1, 1]} : vector<8x96xf32> to vector<8x32xf32>
    %36 = vector.shape_cast %35 : vector<8x32xf32> to vector<8x4x8xf32>
    %37 = tpu.iota {dimensions = array<i32: 0>} : vector<8x8xi32>
    %38 = tpu.iota {dimensions = array<i32: 1>} : vector<8x8xi32>
    %39 = arith.cmpi sge, %37, %38 : vector<8x8xi32>
    "tpu.trace_start"() <{level = 10 : i32, message = "qhd,khd->hqk"}> : () -> ()
    %cst_15 = arith.constant dense<0.000000e+00> : vector<4x8x8xf32>
    %40 = tpu.matmul %32, %34, %cst_15 {dimension_numbers = #tpu.dot_dimension_numbers<[2], [2], [0], [0], [0, 1, 0, 0, 1, 0], [1], [1]>} : vector<8x4x8xf32>, vector<8x4x8xf32>, vector<4x8x8xf32> -> vector<4x8x8xf32>
    "tpu.trace_stop"() : () -> ()
    %cst_16 = arith.constant 0.353553385 : f32
    %41 = vector.broadcast %cst_16 : f32 to vector<4x8x8xf32>
    %42 = arith.mulf %40, %41 : vector<4x8x8xf32>
    %43 = vector.shape_cast %39 : vector<8x8xi1> to vector<1x8x8xi1>
    %cst_17 = arith.constant -1.000000e+30 : f32
    %44 = vector.shape_cast %43 : vector<1x8x8xi1> to vector<1x8x8xi1>
    %45 = vector.broadcast %44 : vector<1x8x8xi1> to vector<4x8x8xi1>
    %46 = vector.broadcast %cst_17 : f32 to vector<4x8x8xf32>
    %47 = arith.select %45, %42, %46 : vector<4x8x8xi1>, vector<4x8x8xf32>
    %cst_18 = arith.constant dense<0xFF800000> : vector<4x8xf32>
    %48 = vector.multi_reduction <maximumf>, %47, %cst_18 [2] : vector<4x8x8xf32> to vector<4x8xf32>
    %49 = vector.shape_cast %48 : vector<4x8xf32> to vector<4x8x1xf32>
    %50 = vector.broadcast %49 : vector<4x8x1xf32> to vector<4x8x8xf32>
    %51 = arith.subf %47, %50 : vector<4x8x8xf32>
    %52 = math.exp %51 : vector<4x8x8xf32>
    %cst_19 = arith.constant dense<0.000000e+00> : vector<4x8xf32>
    %53 = vector.multi_reduction <add>, %52, %cst_19 [2] : vector<4x8x8xf32> to vector<4x8xf32>
    %54 = vector.shape_cast %53 : vector<4x8xf32> to vector<4x8x1xf32>
    %55 = tpu.reciprocal %54 {approx = true} : vector<4x8x1xf32> -> vector<4x8x1xf32>
    %56 = vector.broadcast %55 : vector<4x8x1xf32> to vector<4x8x8xf32>
    %57 = arith.mulf %52, %56 : vector<4x8x8xf32>
    "tpu.trace_start"() <{level = 10 : i32, message = "hqk,khd->qhd"}> : () -> ()
    %cst_20 = arith.constant dense<0.000000e+00> : vector<4x8x8xf32>
    %58 = tpu.matmul %36, %57, %cst_20 {dimension_numbers = #tpu.dot_dimension_numbers<[0], [2], [2], [1], [0, 1, 0, 2, 1, 1], [1], [0]>} : vector<8x4x8xf32>, vector<4x8x8xf32>, vector<4x8x8xf32> -> vector<4x8x8xf32>
    %59 = tpu.transpose %58, [2, 0, 1] : vector<4x8x8xf32> -> vector<8x4x8xf32>
    "tpu.trace_stop"() : () -> ()
    %60 = vector.shape_cast %59 : vector<8x4x8xf32> to vector<8x32xf32>
    %c0_21 = arith.constant 0 : index
    %c0_22 = arith.constant 0 : index
    %61 = vector.load %arg6[%c0_21, %c0_22] : memref<32x32xf32, #tpu.memory_space<vmem>>, vector<32x32xf32>
    %cst_23 = arith.constant dense<0.000000e+00> : vector<8x32xf32>
    %62 = tpu.matmul %60, %61, %cst_23 {dimension_numbers = #tpu.dot_dimension_numbers<[1], [0], [0], [1], [0, 0, 1, 1], [], []>} : vector<8x32xf32>, vector<32x32xf32>, vector<8x32xf32> -> vector<8x32xf32>
    %c0_24 = arith.constant 0 : index
    %c0_25 = arith.constant 0 : index
    %63 = vector.load %arg7[%c0_24, %c0_25] : memref<1x32xf32, #tpu.memory_space<vmem>>, vector<1x32xf32>
    %64 = vector.broadcast %63 : vector<1x32xf32> to vector<8x32xf32>
    %65 = arith.addf %62, %64 : vector<8x32xf32>
    %66 = arith.addf %1, %65 : vector<8x32xf32>
    %c0_26 = arith.constant 0 : index
    %c0_27 = arith.constant 0 : index
    %67 = vector.load %arg8[%c0_26, %c0_27] : memref<1x32xf32, #tpu.memory_space<vmem>>, vector<1x32xf32>
    %c0_28 = arith.constant 0 : index
    %c0_29 = arith.constant 0 : index
    %68 = vector.load %arg9[%c0_28, %c0_29] : memref<1x32xf32, #tpu.memory_space<vmem>>, vector<1x32xf32>
    %cst_30 = arith.constant dense<0.000000e+00> : vector<8xf32>
    %69 = vector.multi_reduction <add>, %66, %cst_30 [1] : vector<8x32xf32> to vector<8xf32>
    %70 = vector.shape_cast %69 : vector<8xf32> to vector<8x1xf32>
    %cst_31 = arith.constant 3.200000e+01 : f32
    %71 = vector.broadcast %cst_31 : f32 to vector<8x1xf32>
    %72 = arith.divf %70, %71 : vector<8x1xf32>
    %73 = vector.broadcast %72 : vector<8x1xf32> to vector<8x32xf32>
    %74 = arith.subf %66, %73 : vector<8x32xf32>
    %75 = arith.mulf %74, %74 : vector<8x32xf32>
    %cst_32 = arith.constant dense<0.000000e+00> : vector<8xf32>
    %76 = vector.multi_reduction <add>, %75, %cst_32 [1] : vector<8x32xf32> to vector<8xf32>
    %77 = vector.shape_cast %76 : vector<8xf32> to vector<8x1xf32>
    %cst_33 = arith.constant 3.200000e+01 : f32
    %78 = vector.broadcast %cst_33 : f32 to vector<8x1xf32>
    %79 = arith.divf %77, %78 : vector<8x1xf32>
    %80 = vector.broadcast %72 : vector<8x1xf32> to vector<8x32xf32>
    %81 = arith.subf %66, %80 : vector<8x32xf32>
    %cst_34 = arith.constant 9.99999974E-6 : f32
    %82 = vector.broadcast %cst_34 : f32 to vector<8x1xf32>
    %83 = arith.addf %79, %82 : vector<8x1xf32>
    %84 = math.rsqrt %83 : vector<8x1xf32>
    %85 = vector.broadcast %84 : vector<8x1xf32> to vector<8x32xf32>
    %86 = arith.mulf %81, %85 : vector<8x32xf32>
    %87 = vector.broadcast %67 : vector<1x32xf32> to vector<8x32xf32>
    %88 = arith.mulf %86, %87 : vector<8x32xf32>
    %89 = vector.broadcast %68 : vector<1x32xf32> to vector<8x32xf32>
    %90 = arith.addf %88, %89 : vector<8x32xf32>
    %c0_35 = arith.constant 0 : index
    %c0_36 = arith.constant 0 : index
    %91 = vector.load %arg10[%c0_35, %c0_36] : memref<32x128xf32, #tpu.memory_space<vmem>>, vector<32x128xf32>
    %cst_37 = arith.constant dense<0.000000e+00> : vector<8x128xf32>
    %92 = tpu.matmul %90, %91, %cst_37 {dimension_numbers = #tpu.dot_dimension_numbers<[1], [0], [0], [1], [0, 0, 1, 1], [], []>} : vector<8x32xf32>, vector<32x128xf32>, vector<8x128xf32> -> vector<8x128xf32>
    %c0_38 = arith.constant 0 : index
    %c0_39 = arith.constant 0 : index
    %93 = vector.load %arg11[%c0_38, %c0_39] : memref<1x128xf32, #tpu.memory_space<vmem>>, vector<1x128xf32>
    %94 = vector.broadcast %93 : vector<1x128xf32> to vector<8x128xf32>
    %95 = arith.addf %92, %94 : vector<8x128xf32>
    %cst_40 = arith.constant 0.636619746 : f32
    %96 = math.sqrt %cst_40 : f32
    %cst_41 = arith.constant 5.000000e-01 : f32
    %97 = vector.broadcast %cst_41 : f32 to vector<8x128xf32>
    %98 = arith.mulf %97, %95 : vector<8x128xf32>
    %cst_42 = arith.constant 4.471500e-02 : f32
    %99 = vector.broadcast %cst_42 : f32 to vector<8x128xf32>
    %100 = arith.mulf %99, %95 : vector<8x128xf32>
    %101 = arith.mulf %100, %95 : vector<8x128xf32>
    %102 = arith.mulf %101, %95 : vector<8x128xf32>
    %103 = arith.addf %95, %102 : vector<8x128xf32>
    %104 = vector.broadcast %96 : f32 to vector<8x128xf32>
    %105 = arith.mulf %104, %103 : vector<8x128xf32>
    %106 = math.tanh %105 : vector<8x128xf32>
    %cst_43 = arith.constant 1.000000e+00 : f32
    %107 = vector.broadcast %cst_43 : f32 to vector<8x128xf32>
    %108 = arith.addf %107, %106 : vector<8x128xf32>
    %109 = arith.mulf %98, %108 : vector<8x128xf32>
    %c0_44 = arith.constant 0 : index
    %c0_45 = arith.constant 0 : index
    %110 = vector.load %arg12[%c0_44, %c0_45] : memref<128x32xf32, #tpu.memory_space<vmem>>, vector<128x32xf32>
    %cst_46 = arith.constant dense<0.000000e+00> : vector<8x32xf32>
    %111 = tpu.matmul %109, %110, %cst_46 {dimension_numbers = #tpu.dot_dimension_numbers<[1], [0], [0], [1], [0, 0, 1, 1], [], []>} : vector<8x128xf32>, vector<128x32xf32>, vector<8x32xf32> -> vector<8x32xf32>
    %c0_47 = arith.constant 0 : index
    %c0_48 = arith.constant 0 : index
    %112 = vector.load %arg13[%c0_47, %c0_48] : memref<1x32xf32, #tpu.memory_space<vmem>>, vector<1x32xf32>
    %113 = vector.broadcast %112 : vector<1x32xf32> to vector<8x32xf32>
    %114 = arith.addf %111, %113 : vector<8x32xf32>
    %115 = arith.addf %66, %114 : vector<8x32xf32>
    %c0_49 = arith.constant 0 : index
    %c0_50 = arith.constant 0 : index
    %c0_51 = arith.constant 0 : index
    %116 = vector.load %arg14[%c0_49, %c0_50, %c0_51] : memref<1x8x32xf32, #tpu.memory_space<vmem>>, vector<1x8x32xf32>
    %117 = vector.shape_cast %116 : vector<1x8x32xf32> to vector<8x32xf32>
    %118 = vector.shape_cast %115 : vector<8x32xf32> to vector<1x8x32xf32>
    tpu.vector_store %arg14[%c0_49, %c0_50, %c0_51], %118 {strides = array<i32>} : memref<1x8x32xf32, #tpu.memory_space<vmem>>, vector<1x8x32xf32>,
    return
  }
  func.func @transform_0(%arg0: i32) -> (i32, i32, i32) {
    %c0_i32 = arith.constant 0 : i32
    %c0_i32_0 = arith.constant 0 : i32
    %c0_i32_1 = arith.constant 0 : i32
    return %arg0, %c0_i32, %c0_i32_0 : i32, i32, i32
  }
  func.func @transform_1(%arg0: i32) -> (i32, i32) {
    %c0_i32 = arith.constant 0 : i32
    %c0_i32_0 = arith.constant 0 : i32
    %c0_i32_1 = arith.constant 0 : i32
    return %c0_i32, %c0_i32_0 : i32, i32
  }
  func.func @transform_2(%arg0: i32) -> (i32, i32) {
    %c0_i32 = arith.constant 0 : i32
    %c0_i32_0 = arith.constant 0 : i32
    %c0_i32_1 = arith.constant 0 : i32
    return %c0_i32, %c0_i32_0 : i32, i32
  }
  func.func @transform_3(%arg0: i32) -> (i32, i32) {
    %c0_i32 = arith.constant 0 : i32
    %c0_i32_0 = arith.constant 0 : i32
    %c0_i32_1 = arith.constant 0 : i32
    return %c0_i32, %c0_i32_0 : i32, i32
  }
  func.func @transform_4(%arg0: i32) -> (i32, i32) {
    %c0_i32 = arith.constant 0 : i32
    %c0_i32_0 = arith.constant 0 : i32
    %c0_i32_1 = arith.constant 0 : i32
    return %c0_i32, %c0_i32_0 : i32, i32
  }
  func.func @transform_5(%arg0: i32) -> (i32, i32) {
    %c0_i32 = arith.constant 0 : i32
    %c0_i32_0 = arith.constant 0 : i32
    %c0_i32_1 = arith.constant 0 : i32
    return %c0_i32, %c0_i32_0 : i32, i32
  }
  func.func @transform_6(%arg0: i32) -> (i32, i32) {
    %c0_i32 = arith.constant 0 : i32
    %c0_i32_0 = arith.constant 0 : i32
    %c0_i32_1 = arith.constant 0 : i32
    return %c0_i32, %c0_i32_0 : i32, i32
  }
  func.func @transform_7(%arg0: i32) -> (i32, i32) {
    %c0_i32 = arith.constant 0 : i32
    %c0_i32_0 = arith.constant 0 : i32
    %c0_i32_1 = arith.constant 0 : i32
    return %c0_i32, %c0_i32_0 : i32, i32
  }
  func.func @transform_8(%arg0: i32) -> (i32, i32) {
    %c0_i32 = arith.constant 0 : i32
    %c0_i32_0 = arith.constant 0 : i32
    %c0_i32_1 = arith.constant 0 : i32
    return %c0_i32, %c0_i32_0 : i32, i32
  }
  func.func @transform_9(%arg0: i32) -> (i32, i32) {
    %c0_i32 = arith.constant 0 : i32
    %c0_i32_0 = arith.constant 0 : i32
    %c0_i32_1 = arith.constant 0 : i32
    return %c0_i32, %c0_i32_0 : i32, i32
  }
  func.func @transform_10(%arg0: i32) -> (i32, i32) {
    %c0_i32 = arith.constant 0 : i32
    %c0_i32_0 = arith.constant 0 : i32
    %c0_i32_1 = arith.constant 0 : i32
    return %c0_i32, %c0_i32_0 : i32, i32
  }
  func.func @transform_11(%arg0: i32) -> (i32, i32) {
    %c0_i32 = arith.constant 0 : i32
    %c0_i32_0 = arith.constant 0 : i32
    %c0_i32_1 = arith.constant 0 : i32
    return %c0_i32, %c0_i32_0 : i32, i32
  }
  func.func @transform_12(%arg0: i32) -> (i32, i32) {
    %c0_i32 = arith.constant 0 : i32
    %c0_i32_0 = arith.constant 0 : i32
    %c0_i32_1 = arith.constant 0 : i32
    return %c0_i32, %c0_i32_0 : i32, i32
  }
  func.func @transform_13(%arg0: i32) -> (i32, i32, i32) {
    %c0_i32 = arith.constant 0 : i32
    %c0_i32_0 = arith.constant 0 : i32
    %c0_i32_1 = arith.constant 0 : i32
    return %arg0, %c0_i32, %c0_i32_0 : i32, i32, i32
  }
}

</mosaic_0001>

<llo_original>
// kernel: tpu_custom_call.1
$region0: #{tpu_custom_call.1}
  #allocation0 [shape = 'u32[]', space=smem, size = 0x4, offset = 0x4, fixed_abs, tag = 'smem constant byte address 0x4 - core index']
  #allocation1 [shape = 'u32[72,128]{1,0:T(1,128)}', space=vmem, size = 0x9000, scoped, tag = 'internal scratch']
  %s0 = inlined_call_operand.vmem [shape: f32[2,8,32], index: 0, kind: input, shape index: {}]
  %s1 = inlined_call_operand.vmem [shape: f32[1,32], index: 1, kind: input, shape index: {}]
  %s2 = inlined_call_operand.vmem [shape: f32[1,32], index: 2, kind: input, shape index: {}]
  %s3 = inlined_call_operand.vmem [shape: f32[32,96], index: 3, kind: input, shape index: {}]
  %s4 = inlined_call_operand.vmem [shape: f32[1,96], index: 4, kind: input, shape index: {}]
  %s5 = inlined_call_operand.vmem [shape: f32[32,32], index: 5, kind: input, shape index: {}]
  %s6 = inlined_call_operand.vmem [shape: f32[1,32], index: 6, kind: input, shape index: {}]
  %s7 = inlined_call_operand.vmem [shape: f32[1,32], index: 7, kind: input, shape index: {}]
  %s8 = inlined_call_operand.vmem [shape: f32[1,32], index: 8, kind: input, shape index: {}]
  %s9 = inlined_call_operand.vmem [shape: f32[32,128], index: 9, kind: input, shape index: {}]
  %s10 = inlined_call_operand.vmem [shape: f32[1,128], index: 10, kind: input, shape index: {}]
  %s11 = inlined_call_operand.vmem [shape: f32[128,32], index: 11, kind: input, shape index: {}]
  %s12 = inlined_call_operand.vmem [shape: f32[1,32], index: 12, kind: input, shape index: {}]
  %s13 = inlined_call_operand.hbm [shape: f32[2,8,32], index: 13, kind: output, shape index: {}]
  %s14 = sld [smem:[#allocation0]]
  $region85: #{tpu_custom_call.1} parent=0
    _
  %s16 = ssub.s32 1, %s14
  %s17 = scalar_select 0, %s16, %s14
  $region1: #{tpu_custom_call.1} parent=0
    #allocation2 [shape = 'u8[8192]{0}', space=vmem, size = 0x2000, scoped, tag = 'output window, operand 0']
    #allocation3 [shape = 's32[2]{0}', space=sflag, size = 0x8, scoped, tag = 'scoped memory for tpu_custom_call.1']
    %18 = vsyncpa [#allocation3], 0
    %s19 = scalar_lea.sflag [#allocation3], 1
    %20 = vsyncpa %s19, 0
    loop: start=0, step=1, limit=4
    $region2: #{tpu_custom_call.1} parent=1 // loop_pre_header
      _
    $region3: #{tpu_custom_call.1} parent=1 // loop_header
      %s22 = sphi 0, %s26
      %p23 = scmp.ge.s32.totalorder %s22, 4
      %s32 = sphi 0, %s34
      %s35 = sphi 0, %s32
      %s36 = sphi 0, %s35
      %s52 = sphi 0, %s36
      %s56 = sphi 0, %s56
      %s58 = sphi 0, %s56
      %s59 = sphi 0, %s58
      %s73 = sphi 0, %s59
      %s77 = sphi 0, %s77
      %s79 = sphi 0, %s77
      %s80 = sphi 0, %s79
      %s94 = sphi 0, %s80
      %s98 = sphi 0, %s98
      %s100 = sphi 0, %s98
      %s101 = sphi 0, %s100
      %s115 = sphi 0, %s101
      %s119 = sphi 0, %s119
      %s121 = sphi 0, %s119
      %s122 = sphi 0, %s121
      %s136 = sphi 0, %s122
      %s140 = sphi 0, %s140
      %s142 = sphi 0, %s140
      %s143 = sphi 0, %s142
      %s157 = sphi 0, %s143
      %s161 = sphi 0, %s161
      %s163 = sphi 0, %s161
      %s164 = sphi 0, %s163
      %s178 = sphi 0, %s164
      %s182 = sphi 0, %s182
      %s184 = sphi 0, %s182
      %s185 = sphi 0, %s184
      %s199 = sphi 0, %s185
      %s203 = sphi 0, %s203
      %s205 = sphi 0, %s203
      %s206 = sphi 0, %s205
      %s220 = sphi 0, %s206
      %s224 = sphi 0, %s224
      %s226 = sphi 0, %s224
      %s227 = sphi 0, %s226
      %s241 = sphi 0, %s227
      %s245 = sphi 0, %s245
      %s247 = sphi 0, %s245
      %s248 = sphi 0, %s247
      %s262 = sphi 0, %s248
      %s266 = sphi 0, %s266
      %s268 = sphi 0, %s266
      %s269 = sphi 0, %s268
      %s283 = sphi 0, %s269
      %s287 = sphi 0, %s287
      %s289 = sphi 0, %s287
      %s290 = sphi 0, %s289
      %s304 = sphi 0, %s290
      %s310 = sphi 0, %s312
      %s313 = sphi 0, %s310
      %s314 = sphi 0, %s313
      %s330 = sphi 0, %s314
    $region4: #{tpu_custom_call.1} parent=1 // loop_header_branch
      %25 = sbr.rel (%p23) target = $region8
    $region5: #{tpu_custom_call.1} parent=1 // loop_body
      %s27 = ssub.s32 %s22, 1
      %s28 = ssub.s32 %s22, 2
      %s29 = sadd.s32 %s22, 1
      %s30 = ssub.s32 %s22, %s29
      %p31 = scmp.eq.s32.totalorder %s30, 0
      %s33 = sadd.s32 %s32, 1
      %s34 = scalar_select %p31, %s32, %s33
      %p37 = pneg %p31
      %p38 = scmp.eq.s32.totalorder %s22, 1
      %p39 = por %p37, %p38
      %p40 = scmp.ne.s32.totalorder %s32, %s35
      %p41 = scmp.eq.s32.totalorder %s22, 0
      %p42 = por %p40, %p41
      %p43 = scmp.ne.s32.totalorder %s32, %s35
      %p44 = scmp.eq.s32.totalorder %s27, 1
      %p45 = por %p43, %p44
      %p46 = scmp.ne.s32.totalorder %s35, %s36
      %p47 = scmp.eq.s32.totalorder %s27, 0
      %p48 = por %p46, %p47
      %p49 = scmp.ne.s32.totalorder %s35, %s36
      %p50 = scmp.eq.s32.totalorder %s28, 1
      %p51 = por %p49, %p50
      %p53 = scmp.ne.s32.totalorder %s36, %s52
      %p54 = scmp.eq.s32.totalorder %s28, 0
      %p55 = por %p53, %p54
      %s57 = sadd.s32 %s56, 1
      %p60 = scmp.eq.s32.totalorder %s22, 1
      %p61 = scmp.ne.s32.totalorder %s56, %s58
      %p62 = scmp.eq.s32.totalorder %s22, 0
      %p63 = por %p61, %p62
      %p64 = scmp.ne.s32.totalorder %s56, %s58
      %p65 = scmp.eq.s32.totalorder %s27, 1
      %p66 = por %p64, %p65
      %p67 = scmp.ne.s32.totalorder %s58, %s59
      %p68 = scmp.eq.s32.totalorder %s27, 0
      %p69 = por %p67, %p68
      %p70 = scmp.ne.s32.totalorder %s58, %s59
      %p71 = scmp.eq.s32.totalorder %s28, 1
      %p72 = por %p70, %p71
      %p74 = scmp.ne.s32.totalorder %s59, %s73
      %p75 = scmp.eq.s32.totalorder %s28, 0
      %p76 = por %p74, %p75
      %s78 = sadd.s32 %s77, 1
      %p81 = scmp.eq.s32.totalorder %s22, 1
      %p82 = scmp.ne.s32.totalorder %s77, %s79
      %p83 = scmp.eq.s32.totalorder %s22, 0
      %p84 = por %p82, %p83
      %p85 = scmp.ne.s32.totalorder %s77, %s79
      %p86 = scmp.eq.s32.totalorder %s27, 1
      %p87 = por %p85, %p86
      %p88 = scmp.ne.s32.totalorder %s79, %s80
      %p89 = scmp.eq.s32.totalorder %s27, 0
      %p90 = por %p88, %p89
      %p91 = scmp.ne.s32.totalorder %s79, %s80
      %p92 = scmp.eq.s32.totalorder %s28, 1
      %p93 = por %p91, %p92
      %p95 = scmp.ne.s32.totalorder %s80, %s94
      %p96 = scmp.eq.s32.totalorder %s28, 0
      %p97 = por %p95, %p96
      %s99 = sadd.s32 %s98, 1
      %p102 = scmp.eq.s32.totalorder %s22, 1
      %p103 = scmp.ne.s32.totalorder %s98, %s100
      %p104 = scmp.eq.s32.totalorder %s22, 0
      %p105 = por %p103, %p104
      %p106 = scmp.ne.s32.totalorder %s98, %s100
      %p107 = scmp.eq.s32.totalorder %s27, 1
      %p108 = por %p106, %p107
      %p109 = scmp.ne.s32.totalorder %s100, %s101
      %p110 = scmp.eq.s32.totalorder %s27, 0
      %p111 = por %p109, %p110
      %p112 = scmp.ne.s32.totalorder %s100, %s101
      %p113 = scmp.eq.s32.totalorder %s28, 1
      %p114 = por %p112, %p113
      %p116 = scmp.ne.s32.totalorder %s101, %s115
      %p117 = scmp.eq.s32.totalorder %s28, 0
      %p118 = por %p116, %p117
      %s120 = sadd.s32 %s119, 1
      %p123 = scmp.eq.s32.totalorder %s22, 1
      %p124 = scmp.ne.s32.totalorder %s119, %s121
      %p125 = scmp.eq.s32.totalorder %s22, 0
      %p126 = por %p124, %p125
      %p127 = scmp.ne.s32.totalorder %s119, %s121
      %p128 = scmp.eq.s32.totalorder %s27, 1
      %p129 = por %p127, %p128
      %p130 = scmp.ne.s32.totalorder %s121, %s122
      %p131 = scmp.eq.s32.totalorder %s27, 0
      %p132 = por %p130, %p131
      %p133 = scmp.ne.s32.totalorder %s121, %s122
      %p134 = scmp.eq.s32.totalorder %s28, 1
      %p135 = por %p133, %p134
      %p137 = scmp.ne.s32.totalorder %s122, %s136
      %p138 = scmp.eq.s32.totalorder %s28, 0
      %p139 = por %p137, %p138
      %s141 = sadd.s32 %s140, 1
      %p144 = scmp.eq.s32.totalorder %s22, 1
      %p145 = scmp.ne.s32.totalorder %s140, %s142
      %p146 = scmp.eq.s32.totalorder %s22, 0
      %p147 = por %p145, %p146
      %p148 = scmp.ne.s32.totalorder %s140, %s142
      %p149 = scmp.eq.s32.totalorder %s27, 1
      %p150 = por %p148, %p149
      %p151 = scmp.ne.s32.totalorder %s142, %s143
      %p152 = scmp.eq.s32.totalorder %s27, 0
      %p153 = por %p151, %p152
      %p154 = scmp.ne.s32.totalorder %s142, %s143
      %p155 = scmp.eq.s32.totalorder %s28, 1
      %p156 = por %p154, %p155
      %p158 = scmp.ne.s32.totalorder %s143, %s157
      %p159 = scmp.eq.s32.totalorder %s28, 0
      %p160 = por %p158, %p159
      %s162 = sadd.s32 %s161, 1
      %p165 = scmp.eq.s32.totalorder %s22, 1
      %p166 = scmp.ne.s32.totalorder %s161, %s163
      %p167 = scmp.eq.s32.totalorder %s22, 0
      %p168 = por %p166, %p167
      %p169 = scmp.ne.s32.totalorder %s161, %s163
      %p170 = scmp.eq.s32.totalorder %s27, 1
      %p171 = por %p169, %p170
      %p172 = scmp.ne.s32.totalorder %s163, %s164
      %p173 = scmp.eq.s32.totalorder %s27, 0
      %p174 = por %p172, %p173
      %p175 = scmp.ne.s32.totalorder %s163, %s164
      %p176 = scmp.eq.s32.totalorder %s28, 1
      %p177 = por %p175, %p176
      %p179 = scmp.ne.s32.totalorder %s164, %s178
      %p180 = scmp.eq.s32.totalorder %s28, 0
      %p181 = por %p179, %p180
      %s183 = sadd.s32 %s182, 1
      %p186 = scmp.eq.s32.totalorder %s22, 1
      %p187 = scmp.ne.s32.totalorder %s182, %s184
      %p188 = scmp.eq.s32.totalorder %s22, 0
      %p189 = por %p187, %p188
      %p190 = scmp.ne.s32.totalorder %s182, %s184
      %p191 = scmp.eq.s32.totalorder %s27, 1
      %p192 = por %p190, %p191
      %p193 = scmp.ne.s32.totalorder %s184, %s185
      %p194 = scmp.eq.s32.totalorder %s27, 0
      %p195 = por %p193, %p194
      %p196 = scmp.ne.s32.totalorder %s184, %s185
      %p197 = scmp.eq.s32.totalorder %s28, 1
      %p198 = por %p196, %p197
      %p200 = scmp.ne.s32.totalorder %s185, %s199
      %p201 = scmp.eq.s32.totalorder %s28, 0
      %p202 = por %p200, %p201
      %s204 = sadd.s32 %s203, 1
      %p207 = scmp.eq.s32.totalorder %s22, 1
      %p208 = scmp.ne.s32.totalorder %s203, %s205
      %p209 = scmp.eq.s32.totalorder %s22, 0
      %p210 = por %p208, %p209
      %p211 = scmp.ne.s32.totalorder %s203, %s205
      %p212 = scmp.eq.s32.totalorder %s27, 1
      %p213 = por %p211, %p212
      %p214 = scmp.ne.s32.totalorder %s205, %s206
      %p215 = scmp.eq.s32.totalorder %s27, 0
      %p216 = por %p214, %p215
      %p217 = scmp.ne.s32.totalorder %s205, %s206
      %p218 = scmp.eq.s32.totalorder %s28, 1
      %p219 = por %p217, %p218
      %p221 = scmp.ne.s32.totalorder %s206, %s220
      %p222 = scmp.eq.s32.totalorder %s28, 0
      %p223 = por %p221, %p222
      %s225 = sadd.s32 %s224, 1
      %p228 = scmp.eq.s32.totalorder %s22, 1
      %p229 = scmp.ne.s32.totalorder %s224, %s226
      %p230 = scmp.eq.s32.totalorder %s22, 0
      %p231 = por %p229, %p230
      %p232 = scmp.ne.s32.totalorder %s224, %s226
      %p233 = scmp.eq.s32.totalorder %s27, 1
      %p234 = por %p232, %p233
      %p235 = scmp.ne.s32.totalorder %s226, %s227
      %p236 = scmp.eq.s32.totalorder %s27, 0
      %p237 = por %p235, %p236
      %p238 = scmp.ne.s32.totalorder %s226, %s227
      %p239 = scmp.eq.s32.totalorder %s28, 1
      %p240 = por %p238, %p239
      %p242 = scmp.ne.s32.totalorder %s227, %s241
      %p243 = scmp.eq.s32.totalorder %s28, 0
      %p244 = por %p242, %p243
      %s246 = sadd.s32 %s245, 1
      %p249 = scmp.eq.s32.totalorder %s22, 1
      %p250 = scmp.ne.s32.totalorder %s245, %s247
      %p251 = scmp.eq.s32.totalorder %s22, 0
      %p252 = por %p250, %p251
      %p253 = scmp.ne.s32.totalorder %s245, %s247
      %p254 = scmp.eq.s32.totalorder %s27, 1
      %p255 = por %p253, %p254
      %p256 = scmp.ne.s32.totalorder %s247, %s248
      %p257 = scmp.eq.s32.totalorder %s27, 0
      %p258 = por %p256, %p257
      %p259 = scmp.ne.s32.totalorder %s247, %s248
      %p260 = scmp.eq.s32.totalorder %s28, 1
      %p261 = por %p259, %p260
      %p263 = scmp.ne.s32.totalorder %s248, %s262
      %p264 = scmp.eq.s32.totalorder %s28, 0
      %p265 = por %p263, %p264
      %s267 = sadd.s32 %s266, 1
      %p270 = scmp.eq.s32.totalorder %s22, 1
      %p271 = scmp.ne.s32.totalorder %s266, %s268
      %p272 = scmp.eq.s32.totalorder %s22, 0
      %p273 = por %p271, %p272
      %p274 = scmp.ne.s32.totalorder %s266, %s268
      %p275 = scmp.eq.s32.totalorder %s27, 1
      %p276 = por %p274, %p275
      %p277 = scmp.ne.s32.totalorder %s268, %s269
      %p278 = scmp.eq.s32.totalorder %s27, 0
      %p279 = por %p277, %p278
      %p280 = scmp.ne.s32.totalorder %s268, %s269
      %p281 = scmp.eq.s32.totalorder %s28, 1
      %p282 = por %p280, %p281
      %p284 = scmp.ne.s32.totalorder %s269, %s283
      %p285 = scmp.eq.s32.totalorder %s28, 0
      %p286 = por %p284, %p285
      %s288 = sadd.s32 %s287, 1
      %p291 = scmp.eq.s32.totalorder %s22, 1
      %p292 = scmp.ne.s32.totalorder %s287, %s289
      %p293 = scmp.eq.s32.totalorder %s22, 0
      %p294 = por %p292, %p293
      %p295 = scmp.ne.s32.totalorder %s287, %s289
      %p296 = scmp.eq.s32.totalorder %s27, 1
      %p297 = por %p295, %p296
      %p298 = scmp.ne.s32.totalorder %s289, %s290
      %p299 = scmp.eq.s32.totalorder %s27, 0
      %p300 = por %p298, %p299
      %p301 = scmp.ne.s32.totalorder %s289, %s290
      %p302 = scmp.eq.s32.totalorder %s28, 1
      %p303 = por %p301, %p302
      %p305 = scmp.ne.s32.totalorder %s290, %s304
      %p306 = scmp.eq.s32.totalorder %s28, 0
      %p307 = por %p305, %p306
      %s308 = ssub.s32 %s22, %s29
      %p309 = scmp.eq.s32.totalorder %s308, 0
      %s311 = sadd.s32 %s310, 1
      %s312 = scalar_select %p309, %s310, %s311
      %p315 = pneg %p309
      %p316 = scmp.eq.s32.totalorder %s22, 1
      %p317 = por %p315, %p316
      %p318 = scmp.ne.s32.totalorder %s310, %s313
      %p319 = scmp.eq.s32.totalorder %s22, 0
      %p320 = por %p318, %p319
      %p321 = scmp.ne.s32.totalorder %s310, %s313
      %p322 = scmp.eq.s32.totalorder %s27, 1
      %p323 = por %p321, %p322
      %p324 = scmp.ne.s32.totalorder %s313, %s314
      %p325 = scmp.eq.s32.totalorder %s27, 0
      %p326 = por %p324, %p325
      %p327 = scmp.ne.s32.totalorder %s313, %s314
      %p328 = scmp.eq.s32.totalorder %s28, 1
      %p329 = por %p327, %p328
      %p331 = scmp.ne.s32.totalorder %s314, %s330
      %p332 = scmp.eq.s32.totalorder %s28, 0
      %p333 = por %p331, %p332
      %p334 = scmp.le.s32.totalorder 1, %s22
      %p335 = scmp.lt.s32.totalorder %s22, 3
      %p336 = pnand %p334, %p335
      %p337 = pneg %p336
      // Predicated region
      $region9: #{tpu_custom_call.1} parent=5 // pred_check
        _
      $region10: #{tpu_custom_call.1} parent=5 // pred_check_branch
        %339 = sbr.rel (%p336) target = $region12
      $region11: #{tpu_custom_call.1} parent=5 // pred_region
        %s340 = ssub.s32 %s22, 1
        // Predicated region
        $region13: #{tpu_custom_call.1} parent=11 // pred_check
          %p341 = pneg %p69
        $region14: #{tpu_custom_call.1} parent=11 // pred_check_branch
          %343 = sbr.rel (%p341) target = $region16
        $region15: #{tpu_custom_call.1} parent=11 // pred_region
          _
        $region16: #{tpu_custom_call.1} parent=11 // pred_fallthru
          _
        // Predicated region
        $region17: #{tpu_custom_call.1} parent=11 // pred_check
          %p344 = pneg %p90
        $region18: #{tpu_custom_call.1} parent=11 // pred_check_branch
          %346 = sbr.rel (%p344) target = $region20
        $region19: #{tpu_custom_call.1} parent=11 // pred_region
          _
        $region20: #{tpu_custom_call.1} parent=11 // pred_fallthru
          _
        // Predicated region
        $region21: #{tpu_custom_call.1} parent=11 // pred_check
          %p347 = pneg %p111
        $region22: #{tpu_custom_call.1} parent=11 // pred_check_branch
          %349 = sbr.rel (%p347) target = $region24
        $region23: #{tpu_custom_call.1} parent=11 // pred_region
          _
        $region24: #{tpu_custom_call.1} parent=11 // pred_fallthru
          _
        // Predicated region
        $region25: #{tpu_custom_call.1} parent=11 // pred_check
          %p350 = pneg %p132
        $region26: #{tpu_custom_call.1} parent=11 // pred_check_branch
          %352 = sbr.rel (%p350) target = $region28
        $region27: #{tpu_custom_call.1} parent=11 // pred_region
          _
        $region28: #{tpu_custom_call.1} parent=11 // pred_fallthru
          _
        // Predicated region
        $region29: #{tpu_custom_call.1} parent=11 // pred_check
          %p353 = pneg %p153
        $region30: #{tpu_custom_call.1} parent=11 // pred_check_branch
          %355 = sbr.rel (%p353) target = $region32
        $region31: #{tpu_custom_call.1} parent=11 // pred_region
          _
        $region32: #{tpu_custom_call.1} parent=11 // pred_fallthru
          _
        // Predicated region
        $region33: #{tpu_custom_call.1} parent=11 // pred_check
          %p356 = pneg %p174
        $region34: #{tpu_custom_call.1} parent=11 // pred_check_branch
          %358 = sbr.rel (%p356) target = $region36
        $region35: #{tpu_custom_call.1} parent=11 // pred_region
          _
        $region36: #{tpu_custom_call.1} parent=11 // pred_fallthru
          _
        // Predicated region
        $region37: #{tpu_custom_call.1} parent=11 // pred_check
          %p359 = pneg %p195
        $region38: #{tpu_custom_call.1} parent=11 // pred_check_branch
          %361 = sbr.rel (%p359) target = $region40
        $region39: #{tpu_custom_call.1} parent=11 // pred_region
          _
        $region40: #{tpu_custom_call.1} parent=11 // pred_fallthru
          _
        // Predicated region
        $region41: #{tpu_custom_call.1} parent=11 // pred_check
          %p362 = pneg %p216
        $region42: #{tpu_custom_call.1} parent=11 // pred_check_branch
          %364 = sbr.rel (%p362) target = $region44
        $region43: #{tpu_custom_call.1} parent=11 // pred_region
          _
        $region44: #{tpu_custom_call.1} parent=11 // pred_fallthru
          _
        // Predicated region
        $region45: #{tpu_custom_call.1} parent=11 // pred_check
          %p365 = pneg %p237
        $region46: #{tpu_custom_call.1} parent=11 // pred_check_branch
          %367 = sbr.rel (%p365) target = $region48
        $region47: #{tpu_custom_call.1} parent=11 // pred_region
          _
        $region48: #{tpu_custom_call.1} parent=11 // pred_fallthru
          _
        // Predicated region
        $region49: #{tpu_custom_call.1} parent=11 // pred_check
          %p368 = pneg %p258
        $region50: #{tpu_custom_call.1} parent=11 // pred_check_branch
          %370 = sbr.rel (%p368) target = $region52
        $region51: #{tpu_custom_call.1} parent=11 // pred_region
          _
        $region52: #{tpu_custom_call.1} parent=11 // pred_fallthru
          _
        // Predicated region
        $region53: #{tpu_custom_call.1} parent=11 // pred_check
          %p371 = pneg %p279
        $region54: #{tpu_custom_call.1} parent=11 // pred_check_branch
          %373 = sbr.rel (%p371) target = $region56
        $region55: #{tpu_custom_call.1} parent=11 // pred_region
          _
        $region56: #{tpu_custom_call.1} parent=11 // pred_fallthru
          _
        // Predicated region
        $region57: #{tpu_custom_call.1} parent=11 // pred_check
          %p374 = pneg %p300
        $region58: #{tpu_custom_call.1} parent=11 // pred_check_branch
          %376 = sbr.rel (%p374) target = $region60
        $region59: #{tpu_custom_call.1} parent=11 // pred_region
          _
        $region60: #{tpu_custom_call.1} parent=11 // pred_fallthru
          _
      $region12: #{tpu_custom_call.1} parent=5 // pred_fallthru
        _
      %p377 = scmp.lt.s32.totalorder %s22, 2
      // Predicated region
      $region61: #{tpu_custom_call.1} parent=5 // pred_check
        %p378 = pneg %p377
      $region62: #{tpu_custom_call.1} parent=5 // pred_check_branch
        %380 = sbr.rel (%p378) target = $region64
      $region63: #{tpu_custom_call.1} parent=5 // pred_region
        // Predicated region
        $region65: #{tpu_custom_call.1} parent=63 // pred_check
          %p381 = pneg %p42
        $region66: #{tpu_custom_call.1} parent=63 // pred_check_branch
          %383 = sbr.rel (%p381) target = $region68
        $region67: #{tpu_custom_call.1} parent=63 // pred_region
          %p384 = scmp.lt.s32.totalorder %s22, 1
          %s385 = scalar_select %p384, %s22, 1
          %s386 = smul.addr %s385, 8
          %s387 = scalar_lea.vmem %s0, %s386
        $region68: #{tpu_custom_call.1} parent=63 // pred_fallthru
          _
      $region64: #{tpu_custom_call.1} parent=5 // pred_fallthru
        _
      %p388 = scmp.le.s32.totalorder 1, %s22
      %p389 = scmp.lt.s32.totalorder %s22, 3
      %p390 = pnand %p388, %p389
      %p391 = pneg %p390
      // Predicated region
      $region69: #{tpu_custom_call.1} parent=5 // pred_check
        _
      $region70: #{tpu_custom_call.1} parent=5 // pred_check_branch
        %393 = sbr.rel (%p390) target = $region72
      $region71: #{tpu_custom_call.1} parent=5 // pred_region
        %s394 = ssub.s32 %s22, 1
        %p395 = scmp.lt.s32.totalorder %s27, 1
        %s396 = scalar_select %p395, %s27, 1
        %s397 = smul.addr %s396, 8
        %s398 = scalar_lea.vmem %s0, %s397
        %p399 = pneg %p48
        %p400 = pneg %p45
        %p401 = pneg %p69
        %p402 = pneg %p66
        %p403 = pneg %p90
        %p404 = pneg %p87
        %p405 = pneg %p111
        %p406 = pneg %p108
        %p407 = pneg %p132
        %p408 = pneg %p129
        %p409 = pneg %p153
        %p410 = pneg %p150
        %p411 = pneg %p174
        %p412 = pneg %p171
        %p413 = pneg %p195
        %p414 = pneg %p192
        %p415 = pneg %p216
        %p416 = pneg %p213
        %p417 = pneg %p237
        %p418 = pneg %p234
        %p419 = pneg %p258
        %p420 = pneg %p255
        %p421 = pneg %p279
        %p422 = pneg %p276
        %p423 = pneg %p300
        %p424 = pneg %p297
        %p425 = pneg %p326
        %p426 = pneg %p323
        %s427 = sand.u32 %s313, 1
        %s428 = scalar_lea.sflag [#allocation3], %s427
        %s429 = sand.u32 %s313, 1
        %s430 = smul.addr %s429, 8
        %s431 = scalar_lea.vmem [#allocation2], %s430
        %p432 = scmp.lt.s32.totalorder %s27, 1
        %s433 = scalar_select %p432, %s27, 1
        %s434 = smul.addr %s433, 8
        %s435 = scalar_lea.vmem %s0, %s434
        %v436 = vld [vmem:[%s435] sm:$0xff]
        %v437 = vld [vmem:[%s1] sm:$0x1]
        %v438 = vld [vmem:[%s2] sm:$0x1]
        %vm439 = vcmask 261120
        %v440 = vsel %vm439, %v436, 0.0
        %441 = vadd.xlane.f32.xlu0 %v440
        %v442 = vpop.xlane.xlu0 %441
        %v443 = vrcp.pop 32.0
        %v444 = vmul.f32 32.0, %v443
        %v445 = vsub.f32 1.0, %v444
        %v446 = vmul.f32 %v443, %v445
        %v447 = vadd.f32 %v443, %v446
        %vm448 = vweird.f32 %v443
        %v449 = vsel %vm448, %v443, %v447
        %v450 = vmul.f32 %v442, %v449
        %v451 = vsub.f32 %v436, %v450
        %v452 = vmul.f32 %v451, %v451
        %v453 = vsel %vm439, %v452, 0.0
        %454 = vadd.xlane.f32.xlu0 %v453
        %v455 = vpop.xlane.xlu0 %454
        %v456 = vmul.f32 %v455, %v449
        %v457 = vadd.f32 %v456, 1e-05
        %v458 = vrsqrt.pop %v457
        %v459 = vmul.f32 %v458, %v457
        %v460 = vmul.f32 %v459, %v458
        %v461 = vmul.f32 0.5, %v460
        %v462 = vsub.f32 1.5, %v461
        %v463 = vmul.f32 %v458, %v462
        %vm464 = vweird.f32 %v457
        %vm465 = vweird.f32 %v458
        %vm466 = vmor %vm464, %vm465
        %v467 = vsel %vm466, %v458, %v463
        %v468 = vmul.f32 %v451, %v467
        %v470 = vperm.slane %v437, 0
        %v472 = vmul.f32 %v468, %v470
        %v474 = vperm.slane %v438, 0
        %v476 = vadd.f32 %v472, %v474
        %v477 = vld [vmem:[%s3] sm:$0xff]
        %v478 = vld [vmem:[%s3 + $0x8] sm:$0xff]
        %v479 = vld [vmem:[%s3 + $0x10] sm:$0xff]
        %v480 = vld [vmem:[%s3 + $0x18] sm:$0xff]
        %v481 = vld [vmem:[%s4] sm:$0x1]
        %v483 = vperm.slane %v481, 0
        %v486 = vsel %vm439, %v476, 0
        %488 = vmatpush.msra.mxu0 0.0
        %489 = vmatpush.msra.mxu0 0.0
        %490 = vmatpush.msra.mxu0 0.0
        %491 = vmatpush.msra.mxu0 0.0
        %492 = vmatpush.msra.mxu0 0.0
        %493 = vmatpush.msra.mxu0 0.0
        %494 = vmatpush.msra.mxu0 0.0
        %495 = vmatpush.msra.mxu0 0.0
        %496 = vmatpush.msra.mxu0 0.0
        %497 = vmatpush.msra.mxu0 0.0
        %498 = vmatpush.msra.mxu0 0.0
        %499 = vmatpush.msra.mxu0 0.0
        %500 = vmatpush.msra.mxu0 %v480
        %501 = vmatpush.msra.mxu0 %v479
        %502 = vmatpush.msra.mxu0 %v478
        %503 = vmatpush.msra.mxu0 %v477
        %504 = vmatmul.f32.gmra.mxu0 %v486
        %v505 = vpop.f32.mrf.mxu0
        %v506 = vadd.f32 %v483, %v505
        %507 = vdwg.mxu0
        %509 = vrot.lane.b32.xlu0 %v506, 120
        %v510 = vpop.permute.xlu0 %509
        %511 = vrot.lane.b32.xlu0 %v506, 112
        %v512 = vpop.permute.xlu0 %511
        %513 = vrot.lane.b32.xlu0 %v506, 104
        %v514 = vpop.permute.xlu0 %513
        %v515 = vlaneseq
        %v516 = vshrl.u32 %v515, 7
        %v517 = vlaneseq
        %v518 = vand.u32 %v517, 127
        %vm519 = vcmp.ge.s32.totalorder %v516, %v518
        %520 = vrot.lane.b32.xlu0 %v506, 96
        %v521 = vpop.permute.xlu0 %520
        %522 = vrot.lane.b32.xlu0 %v510, 96
        %v523 = vpop.permute.xlu0 %522
        %524 = vrot.lane.b32.xlu0 %v512, 96
        %v525 = vpop.permute.xlu0 %524
        %526 = vrot.lane.b32.xlu0 %v514, 96
        %v527 = vpop.permute.xlu0 %526
        %532 = vxpose.xlu0.b32.start [1/16] %v521, 128
        %533 = vxpose.xlu0.b32.cont [2/16] 0.0, 128
        %534 = vxpose.xlu0.b32.cont [3/16] 0.0, 128
        %535 = vxpose.xlu0.b32.cont [4/16] 0.0, 128
        %536 = vxpose.xlu0.b32.cont [5/16] 0.0, 128
        %537 = vxpose.xlu0.b32.cont [6/16] 0.0, 128
        %538 = vxpose.xlu0.b32.cont [7/16] 0.0, 128
        %539 = vxpose.xlu0.b32.cont [8/16] 0.0, 128
        %540 = vxpose.xlu0.b32.cont [9/16] 0.0, 128
        %541 = vxpose.xlu0.b32.cont [10/16] 0.0, 128
        %542 = vxpose.xlu0.b32.cont [11/16] 0.0, 128
        %543 = vxpose.xlu0.b32.cont [12/16] 0.0, 128
        %544 = vxpose.xlu0.b32.cont [13/16] 0.0, 128
        %545 = vxpose.xlu0.b32.cont [14/16] 0.0, 128
        %546 = vxpose.xlu0.b32.cont [15/16] 0.0, 128
        %547 = vxpose.xlu0.b32.end [16/16] 0.0, 128
        %v548 = vpop.trf.xlu0
        %v549 = vpop.trf.xlu0
        %v550 = vpop.trf.xlu0
        %v551 = vpop.trf.xlu0
        %v552 = vpop.trf.xlu0
        %v553 = vpop.trf.xlu0
        %v554 = vpop.trf.xlu0
        %v555 = vpop.trf.xlu0
        %v556 = vpop.trf.xlu0
        %v557 = vpop.trf.xlu0
        %v558 = vpop.trf.xlu0
        %v559 = vpop.trf.xlu0
        %v560 = vpop.trf.xlu0
        %v561 = vpop.trf.xlu0
        %v562 = vpop.trf.xlu0
        %v563 = vpop.trf.xlu0
        %564 = vxpose.xlu0.b32.start [1/16] %v523, 128
        %565 = vxpose.xlu0.b32.cont [2/16] 0.0, 128
        %566 = vxpose.xlu0.b32.cont [3/16] 0.0, 128
        %567 = vxpose.xlu0.b32.cont [4/16] 0.0, 128
        %568 = vxpose.xlu0.b32.cont [5/16] 0.0, 128
        %569 = vxpose.xlu0.b32.cont [6/16] 0.0, 128
        %570 = vxpose.xlu0.b32.cont [7/16] 0.0, 128
        %571 = vxpose.xlu0.b32.cont [8/16] 0.0, 128
        %572 = vxpose.xlu0.b32.cont [9/16] 0.0, 128
        %573 = vxpose.xlu0.b32.cont [10/16] 0.0, 128
        %574 = vxpose.xlu0.b32.cont [11/16] 0.0, 128
        %575 = vxpose.xlu0.b32.cont [12/16] 0.0, 128
        %576 = vxpose.xlu0.b32.cont [13/16] 0.0, 128
        %577 = vxpose.xlu0.b32.cont [14/16] 0.0, 128
        %578 = vxpose.xlu0.b32.cont [15/16] 0.0, 128
        %579 = vxpose.xlu0.b32.end [16/16] 0.0, 128
        %v580 = vpop.trf.xlu0
        %v581 = vpop.trf.xlu0
        %v582 = vpop.trf.xlu0
        %v583 = vpop.trf.xlu0
        %v584 = vpop.trf.xlu0
        %v585 = vpop.trf.xlu0
        %v586 = vpop.trf.xlu0
        %v587 = vpop.trf.xlu0
        %v588 = vpop.trf.xlu0
        %v589 = vpop.trf.xlu0
        %v590 = vpop.trf.xlu0
        %v591 = vpop.trf.xlu0
        %v592 = vpop.trf.xlu0
        %v593 = vpop.trf.xlu0
        %v594 = vpop.trf.xlu0
        %v595 = vpop.trf.xlu0
        %596 = vxpose.xlu0.b32.start [1/16] %v525, 128
        %597 = vxpose.xlu0.b32.cont [2/16] 0.0, 128
        %598 = vxpose.xlu0.b32.cont [3/16] 0.0, 128
        %599 = vxpose.xlu0.b32.cont [4/16] 0.0, 128
        %600 = vxpose.xlu0.b32.cont [5/16] 0.0, 128
        %601 = vxpose.xlu0.b32.cont [6/16] 0.0, 128
        %602 = vxpose.xlu0.b32.cont [7/16] 0.0, 128
        %603 = vxpose.xlu0.b32.cont [8/16] 0.0, 128
        %604 = vxpose.xlu0.b32.cont [9/16] 0.0, 128
        %605 = vxpose.xlu0.b32.cont [10/16] 0.0, 128
        %606 = vxpose.xlu0.b32.cont [11/16] 0.0, 128
        %607 = vxpose.xlu0.b32.cont [12/16] 0.0, 128
        %608 = vxpose.xlu0.b32.cont [13/16] 0.0, 128
        %609 = vxpose.xlu0.b32.cont [14/16] 0.0, 128
        %610 = vxpose.xlu0.b32.cont [15/16] 0.0, 128
        %611 = vxpose.xlu0.b32.end [16/16] 0.0, 128
        %v612 = vpop.trf.xlu0
        %v613 = vpop.trf.xlu0
        %v614 = vpop.trf.xlu0
        %v615 = vpop.trf.xlu0
        %v616 = vpop.trf.xlu0
        %v617 = vpop.trf.xlu0
        %v618 = vpop.trf.xlu0
        %v619 = vpop.trf.xlu0
        %v620 = vpop.trf.xlu0
        %v621 = vpop.trf.xlu0
        %v622 = vpop.trf.xlu0
        %v623 = vpop.trf.xlu0
        %v624 = vpop.trf.xlu0
        %v625 = vpop.trf.xlu0
        %v626 = vpop.trf.xlu0
        %v627 = vpop.trf.xlu0
        %628 = vxpose.xlu0.b32.start [1/16] %v527, 128
        %629 = vxpose.xlu0.b32.cont [2/16] 0.0, 128
        %630 = vxpose.xlu0.b32.cont [3/16] 0.0, 128
        %631 = vxpose.xlu0.b32.cont [4/16] 0.0, 128
        %632 = vxpose.xlu0.b32.cont [5/16] 0.0, 128
        %633 = vxpose.xlu0.b32.cont [6/16] 0.0, 128
        %634 = vxpose.xlu0.b32.cont [7/16] 0.0, 128
        %635 = vxpose.xlu0.b32.cont [8/16] 0.0, 128
        %636 = vxpose.xlu0.b32.cont [9/16] 0.0, 128
        %637 = vxpose.xlu0.b32.cont [10/16] 0.0, 128
        %638 = vxpose.xlu0.b32.cont [11/16] 0.0, 128
        %639 = vxpose.xlu0.b32.cont [12/16] 0.0, 128
        %640 = vxpose.xlu0.b32.cont [13/16] 0.0, 128
        %641 = vxpose.xlu0.b32.cont [14/16] 0.0, 128
        %642 = vxpose.xlu0.b32.cont [15/16] 0.0, 128
        %643 = vxpose.xlu0.b32.end [16/16] 0.0, 128
        %v644 = vpop.trf.xlu0
        %v645 = vpop.trf.xlu0
        %v646 = vpop.trf.xlu0
        %v647 = vpop.trf.xlu0
        %v648 = vpop.trf.xlu0
        %v649 = vpop.trf.xlu0
        %v650 = vpop.trf.xlu0
        %v651 = vpop.trf.xlu0
        %v652 = vpop.trf.xlu0
        %v653 = vpop.trf.xlu0
        %v654 = vpop.trf.xlu0
        %v655 = vpop.trf.xlu0
        %v656 = vpop.trf.xlu0
        %v657 = vpop.trf.xlu0
        %v658 = vpop.trf.xlu0
        %v659 = vpop.trf.xlu0
        %vm660 = vcmask 64512
        %v661 = vsel %vm660, %v506, 0
        %663 = vmatpush.msra.mxu0 0.0
        %664 = vmatpush.msra.mxu0 0.0
        %665 = vmatpush.msra.mxu0 0.0
        %666 = vmatpush.msra.mxu0 0.0
        %667 = vmatpush.msra.mxu0 0.0
        %668 = vmatpush.msra.mxu0 0.0
        %669 = vmatpush.msra.mxu0 0.0
        %670 = vmatpush.msra.mxu0 0.0
        %671 = vmatpush.msra.mxu0 0.0
        %672 = vmatpush.msra.mxu0 0.0
        %673 = vmatpush.msra.mxu0 0.0
        %674 = vmatpush.msra.mxu0 0.0
        %675 = vmatpush.msra.mxu0 0.0
        %676 = vmatpush.msra.mxu0 0.0
        %677 = vmatpush.msra.mxu0 0.0
        %678 = vmatpush.msra.mxu0 %v548
        %679 = vmatmul.f32.gmra.mxu0 %v661
        %v680 = vpop.f32.mrf.mxu0
        %v681 = vadd.f32 0.0, %v680
        %682 = vdwg.mxu0
        %v683 = vsel %vm660, %v510, 0
        %685 = vmatpush.msra.mxu0 0.0
        %686 = vmatpush.msra.mxu0 0.0
        %687 = vmatpush.msra.mxu0 0.0
        %688 = vmatpush.msra.mxu0 0.0
        %689 = vmatpush.msra.mxu0 0.0
        %690 = vmatpush.msra.mxu0 0.0
        %691 = vmatpush.msra.mxu0 0.0
        %692 = vmatpush.msra.mxu0 0.0
        %693 = vmatpush.msra.mxu0 0.0
        %694 = vmatpush.msra.mxu0 0.0
        %695 = vmatpush.msra.mxu0 0.0
        %696 = vmatpush.msra.mxu0 0.0
        %697 = vmatpush.msra.mxu0 0.0
        %698 = vmatpush.msra.mxu0 0.0
        %699 = vmatpush.msra.mxu0 0.0
        %700 = vmatpush.msra.mxu0 %v580
        %701 = vmatmul.f32.gmra.mxu0 %v683
        %v702 = vpop.f32.mrf.mxu0
        %v703 = vadd.f32 0.0, %v702
        %704 = vdwg.mxu0
        %v705 = vsel %vm660, %v512, 0
        %707 = vmatpush.msra.mxu0 0.0
        %708 = vmatpush.msra.mxu0 0.0
        %709 = vmatpush.msra.mxu0 0.0
        %710 = vmatpush.msra.mxu0 0.0
        %711 = vmatpush.msra.mxu0 0.0
        %712 = vmatpush.msra.mxu0 0.0
        %713 = vmatpush.msra.mxu0 0.0
        %714 = vmatpush.msra.mxu0 0.0
        %715 = vmatpush.msra.mxu0 0.0
        %716 = vmatpush.msra.mxu0 0.0
        %717 = vmatpush.msra.mxu0 0.0
        %718 = vmatpush.msra.mxu0 0.0
        %719 = vmatpush.msra.mxu0 0.0
        %720 = vmatpush.msra.mxu0 0.0
        %721 = vmatpush.msra.mxu0 0.0
        %722 = vmatpush.msra.mxu0 %v612
        %723 = vmatmul.f32.gmra.mxu0 %v705
        %v724 = vpop.f32.mrf.mxu0
        %v725 = vadd.f32 0.0, %v724
        %726 = vdwg.mxu0
        %v727 = vsel %vm660, %v514, 0
        %729 = vmatpush.msra.mxu0 0.0
        %730 = vmatpush.msra.mxu0 0.0
        %731 = vmatpush.msra.mxu0 0.0
        %732 = vmatpush.msra.mxu0 0.0
        %733 = vmatpush.msra.mxu0 0.0
        %734 = vmatpush.msra.mxu0 0.0
        %735 = vmatpush.msra.mxu0 0.0
        %736 = vmatpush.msra.mxu0 0.0
        %737 = vmatpush.msra.mxu0 0.0
        %738 = vmatpush.msra.mxu0 0.0
        %739 = vmatpush.msra.mxu0 0.0
        %740 = vmatpush.msra.mxu0 0.0
        %741 = vmatpush.msra.mxu0 0.0
        %742 = vmatpush.msra.mxu0 0.0
        %743 = vmatpush.msra.mxu0 0.0
        %744 = vmatpush.msra.mxu0 %v644
        %745 = vmatmul.f32.gmra.mxu0 %v727
        %v746 = vpop.f32.mrf.mxu0
        %v747 = vadd.f32 0.0, %v746
        %748 = vdwg.mxu0
        %v749 = vmul.f32 %v681, 0.35355338
        %v750 = vmul.f32 %v703, 0.35355338
        %v751 = vmul.f32 %v725, 0.35355338
        %v752 = vmul.f32 %v747, 0.35355338
        %v753 = vsel %vm519, 1, 0
        %vm754 = vcmp.eq.s32.totalorder %v753, 1
        %v755 = vsel %vm754, %v749, -1e+30
        %v756 = vsel %vm754, %v750, -1e+30
        %v757 = vsel %vm754, %v751, -1e+30
        %v758 = vsel %vm754, %v752, -1e+30
        %v759 = vsel %vm660, %v755, -inf
        %760 = vmax.xlane.f32.xlu0 %v759
        %v761 = vpop.xlane.xlu0 %760
        %v762 = vsel %vm660, %v756, -inf
        %763 = vmax.xlane.f32.xlu0 %v762
        %v764 = vpop.xlane.xlu0 %763
        %v765 = vsel %vm660, %v757, -inf
        %766 = vmax.xlane.f32.xlu0 %v765
        %v767 = vpop.xlane.xlu0 %766
        %v768 = vsel %vm660, %v758, -inf
        %769 = vmax.xlane.f32.xlu0 %v768
        %v770 = vpop.xlane.xlu0 %769
        %v771 = vsub.f32 %v755, %v761
        %v772 = vsub.f32 %v756, %v764
        %v773 = vsub.f32 %v757, %v767
        %v774 = vsub.f32 %v758, %v770
        %v775 = vmul.f32 %v771, 1.442695
        %v776 = vpow.pop %v775
        %v777 = vmul.f32 %v772, 1.442695
        %v778 = vpow.pop %v777
        %v779 = vmul.f32 %v773, 1.442695
        %v780 = vpow.pop %v779
        %v781 = vmul.f32 %v774, 1.442695
        %v782 = vpow.pop %v781
        %v783 = vsel %vm660, %v776, 0.0
        %784 = vadd.xlane.f32.xlu0 %v783
        %v785 = vpop.xlane.xlu0 %784
        %v786 = vsel %vm660, %v778, 0.0
        %787 = vadd.xlane.f32.xlu0 %v786
        %v788 = vpop.xlane.xlu0 %787
        %v789 = vsel %vm660, %v780, 0.0
        %790 = vadd.xlane.f32.xlu0 %v789
        %v791 = vpop.xlane.xlu0 %790
        %v792 = vsel %vm660, %v782, 0.0
        %793 = vadd.xlane.f32.xlu0 %v792
        %v794 = vpop.xlane.xlu0 %793
        %v795 = vrcp.pop %v785
        %v796 = vrcp.pop %v788
        %v797 = vrcp.pop %v791
        %v798 = vrcp.pop %v794
        %v799 = vmul.f32 %v776, %v795
        %v800 = vmul.f32 %v778, %v796
        %v801 = vmul.f32 %v780, %v797
        %v802 = vmul.f32 %v782, %v798
        %803 = vrot.lane.b32.xlu0 %v506, 64
        %v804 = vpop.permute.xlu0 %803
        %805 = vrot.lane.b32.xlu0 %v510, 64
        %v806 = vpop.permute.xlu0 %805
        %807 = vrot.lane.b32.xlu0 %v512, 64
        %v808 = vpop.permute.xlu0 %807
        %809 = vrot.lane.b32.xlu0 %v514, 64
        %v810 = vpop.permute.xlu0 %809
        %815 = vxpose.xlu0.b32.start [1/16] %v804, 128
        %816 = vxpose.xlu0.b32.cont [2/16] 0.0, 128
        %817 = vxpose.xlu0.b32.cont [3/16] 0.0, 128
        %818 = vxpose.xlu0.b32.cont [4/16] 0.0, 128
        %819 = vxpose.xlu0.b32.cont [5/16] 0.0, 128
        %820 = vxpose.xlu0.b32.cont [6/16] 0.0, 128
        %821 = vxpose.xlu0.b32.cont [7/16] 0.0, 128
        %822 = vxpose.xlu0.b32.cont [8/16] 0.0, 128
        %823 = vxpose.xlu0.b32.cont [9/16] 0.0, 128
        %824 = vxpose.xlu0.b32.cont [10/16] 0.0, 128
        %825 = vxpose.xlu0.b32.cont [11/16] 0.0, 128
        %826 = vxpose.xlu0.b32.cont [12/16] 0.0, 128
        %827 = vxpose.xlu0.b32.cont [13/16] 0.0, 128
        %828 = vxpose.xlu0.b32.cont [14/16] 0.0, 128
        %829 = vxpose.xlu0.b32.cont [15/16] 0.0, 128
        %830 = vxpose.xlu0.b32.end [16/16] 0.0, 128
        %v831 = vpop.trf.xlu0
        %v832 = vpop.trf.xlu0
        %v833 = vpop.trf.xlu0
        %v834 = vpop.trf.xlu0
        %v835 = vpop.trf.xlu0
        %v836 = vpop.trf.xlu0
        %v837 = vpop.trf.xlu0
        %v838 = vpop.trf.xlu0
        %v839 = vpop.trf.xlu0
        %v840 = vpop.trf.xlu0
        %v841 = vpop.trf.xlu0
        %v842 = vpop.trf.xlu0
        %v843 = vpop.trf.xlu0
        %v844 = vpop.trf.xlu0
        %v845 = vpop.trf.xlu0
        %v846 = vpop.trf.xlu0
        %847 = vxpose.xlu0.b32.start [1/16] %v806, 128
        %848 = vxpose.xlu0.b32.cont [2/16] 0.0, 128
        %849 = vxpose.xlu0.b32.cont [3/16] 0.0, 128
        %850 = vxpose.xlu0.b32.cont [4/16] 0.0, 128
        %851 = vxpose.xlu0.b32.cont [5/16] 0.0, 128
        %852 = vxpose.xlu0.b32.cont [6/16] 0.0, 128
        %853 = vxpose.xlu0.b32.cont [7/16] 0.0, 128
        %854 = vxpose.xlu0.b32.cont [8/16] 0.0, 128
        %855 = vxpose.xlu0.b32.cont [9/16] 0.0, 128
        %856 = vxpose.xlu0.b32.cont [10/16] 0.0, 128
        %857 = vxpose.xlu0.b32.cont [11/16] 0.0, 128
        %858 = vxpose.xlu0.b32.cont [12/16] 0.0, 128
        %859 = vxpose.xlu0.b32.cont [13/16] 0.0, 128
        %860 = vxpose.xlu0.b32.cont [14/16] 0.0, 128
        %861 = vxpose.xlu0.b32.cont [15/16] 0.0, 128
        %862 = vxpose.xlu0.b32.end [16/16] 0.0, 128
        %v863 = vpop.trf.xlu0
        %v864 = vpop.trf.xlu0
        %v865 = vpop.trf.xlu0
        %v866 = vpop.trf.xlu0
        %v867 = vpop.trf.xlu0
        %v868 = vpop.trf.xlu0
        %v869 = vpop.trf.xlu0
        %v870 = vpop.trf.xlu0
        %v871 = vpop.trf.xlu0
        %v872 = vpop.trf.xlu0
        %v873 = vpop.trf.xlu0
        %v874 = vpop.trf.xlu0
        %v875 = vpop.trf.xlu0
        %v876 = vpop.trf.xlu0
        %v877 = vpop.trf.xlu0
        %v878 = vpop.trf.xlu0
        %879 = vxpose.xlu0.b32.start [1/16] %v808, 128
        %880 = vxpose.xlu0.b32.cont [2/16] 0.0, 128
        %881 = vxpose.xlu0.b32.cont [3/16] 0.0, 128
        %882 = vxpose.xlu0.b32.cont [4/16] 0.0, 128
        %883 = vxpose.xlu0.b32.cont [5/16] 0.0, 128
        %884 = vxpose.xlu0.b32.cont [6/16] 0.0, 128
        %885 = vxpose.xlu0.b32.cont [7/16] 0.0, 128
        %886 = vxpose.xlu0.b32.cont [8/16] 0.0, 128
        %887 = vxpose.xlu0.b32.cont [9/16] 0.0, 128
        %888 = vxpose.xlu0.b32.cont [10/16] 0.0, 128
        %889 = vxpose.xlu0.b32.cont [11/16] 0.0, 128
        %890 = vxpose.xlu0.b32.cont [12/16] 0.0, 128
        %891 = vxpose.xlu0.b32.cont [13/16] 0.0, 128
        %892 = vxpose.xlu0.b32.cont [14/16] 0.0, 128
        %893 = vxpose.xlu0.b32.cont [15/16] 0.0, 128
        %894 = vxpose.xlu0.b32.end [16/16] 0.0, 128
        %v895 = vpop.trf.xlu0
        %v896 = vpop.trf.xlu0
        %v897 = vpop.trf.xlu0
        %v898 = vpop.trf.xlu0
        %v899 = vpop.trf.xlu0
        %v900 = vpop.trf.xlu0
        %v901 = vpop.trf.xlu0
        %v902 = vpop.trf.xlu0
        %v903 = vpop.trf.xlu0
        %v904 = vpop.trf.xlu0
        %v905 = vpop.trf.xlu0
        %v906 = vpop.trf.xlu0
        %v907 = vpop.trf.xlu0
        %v908 = vpop.trf.xlu0
        %v909 = vpop.trf.xlu0
        %v910 = vpop.trf.xlu0
        %911 = vxpose.xlu0.b32.start [1/16] %v810, 128
        %912 = vxpose.xlu0.b32.cont [2/16] 0.0, 128
        %913 = vxpose.xlu0.b32.cont [3/16] 0.0, 128
        %914 = vxpose.xlu0.b32.cont [4/16] 0.0, 128
        %915 = vxpose.xlu0.b32.cont [5/16] 0.0, 128
        %916 = vxpose.xlu0.b32.cont [6/16] 0.0, 128
        %917 = vxpose.xlu0.b32.cont [7/16] 0.0, 128
        %918 = vxpose.xlu0.b32.cont [8/16] 0.0, 128
        %919 = vxpose.xlu0.b32.cont [9/16] 0.0, 128
        %920 = vxpose.xlu0.b32.cont [10/16] 0.0, 128
        %921 = vxpose.xlu0.b32.cont [11/16] 0.0, 128
        %922 = vxpose.xlu0.b32.cont [12/16] 0.0, 128
        %923 = vxpose.xlu0.b32.cont [13/16] 0.0, 128
        %924 = vxpose.xlu0.b32.cont [14/16] 0.0, 128
        %925 = vxpose.xlu0.b32.cont [15/16] 0.0, 128
        %926 = vxpose.xlu0.b32.end [16/16] 0.0, 128
        %v927 = vpop.trf.xlu0
        %v928 = vpop.trf.xlu0
        %v929 = vpop.trf.xlu0
        %v930 = vpop.trf.xlu0
        %v931 = vpop.trf.xlu0
        %v932 = vpop.trf.xlu0
        %v933 = vpop.trf.xlu0
        %v934 = vpop.trf.xlu0
        %v935 = vpop.trf.xlu0
        %v936 = vpop.trf.xlu0
        %v937 = vpop.trf.xlu0
        %v938 = vpop.trf.xlu0
        %v939 = vpop.trf.xlu0
        %v940 = vpop.trf.xlu0
        %v941 = vpop.trf.xlu0
        %v942 = vpop.trf.xlu0
        %v944 = vsel %vm660, %v831, 0
        %v947 = vsel %vm660, %v799, 0
        %949 = vmatpush.xpose.msra.mxu0 0.0
        %950 = vmatpush.xpose.msra.mxu0 0.0
        %951 = vmatpush.xpose.msra.mxu0 0.0
        %952 = vmatpush.xpose.msra.mxu0 0.0
        %953 = vmatpush.xpose.msra.mxu0 0.0
        %954 = vmatpush.xpose.msra.mxu0 0.0
        %955 = vmatpush.xpose.msra.mxu0 0.0
        %956 = vmatpush.xpose.msra.mxu0 0.0
        %957 = vmatpush.xpose.msra.mxu0 0.0
        %958 = vmatpush.xpose.msra.mxu0 0.0
        %959 = vmatpush.xpose.msra.mxu0 0.0
        %960 = vmatpush.xpose.msra.mxu0 0.0
        %961 = vmatpush.xpose.msra.mxu0 0.0
        %962 = vmatpush.xpose.msra.mxu0 0.0
        %963 = vmatpush.xpose.msra.mxu0 0.0
        %964 = vmatpush.xpose.msra.mxu0 %v947
        %965 = vmatmul.f32.gmra.mxu0 %v944
        %v966 = vpop.f32.mrf.mxu0
        %v967 = vadd.f32 0.0, %v966
        %968 = vdwg.mxu0
        %v970 = vsel %vm660, %v863, 0
        %v973 = vsel %vm660, %v800, 0
        %975 = vmatpush.xpose.msra.mxu0 0.0
        %976 = vmatpush.xpose.msra.mxu0 0.0
        %977 = vmatpush.xpose.msra.mxu0 0.0
        %978 = vmatpush.xpose.msra.mxu0 0.0
        %979 = vmatpush.xpose.msra.mxu0 0.0
        %980 = vmatpush.xpose.msra.mxu0 0.0
        %981 = vmatpush.xpose.msra.mxu0 0.0
        %982 = vmatpush.xpose.msra.mxu0 0.0
        %983 = vmatpush.xpose.msra.mxu0 0.0
        %984 = vmatpush.xpose.msra.mxu0 0.0
        %985 = vmatpush.xpose.msra.mxu0 0.0
        %986 = vmatpush.xpose.msra.mxu0 0.0
        %987 = vmatpush.xpose.msra.mxu0 0.0
        %988 = vmatpush.xpose.msra.mxu0 0.0
        %989 = vmatpush.xpose.msra.mxu0 0.0
        %990 = vmatpush.xpose.msra.mxu0 %v973
        %991 = vmatmul.f32.gmra.mxu0 %v970
        %v992 = vpop.f32.mrf.mxu0
        %v993 = vadd.f32 0.0, %v992
        %994 = vdwg.mxu0
        %v996 = vsel %vm660, %v895, 0
        %v999 = vsel %vm660, %v801, 0
        %1001 = vmatpush.xpose.msra.mxu0 0.0
        %1002 = vmatpush.xpose.msra.mxu0 0.0
        %1003 = vmatpush.xpose.msra.mxu0 0.0
        %1004 = vmatpush.xpose.msra.mxu0 0.0
        %1005 = vmatpush.xpose.msra.mxu0 0.0
        %1006 = vmatpush.xpose.msra.mxu0 0.0
        %1007 = vmatpush.xpose.msra.mxu0 0.0
        %1008 = vmatpush.xpose.msra.mxu0 0.0
        %1009 = vmatpush.xpose.msra.mxu0 0.0
        %1010 = vmatpush.xpose.msra.mxu0 0.0
        %1011 = vmatpush.xpose.msra.mxu0 0.0
        %1012 = vmatpush.xpose.msra.mxu0 0.0
        %1013 = vmatpush.xpose.msra.mxu0 0.0
        %1014 = vmatpush.xpose.msra.mxu0 0.0
        %1015 = vmatpush.xpose.msra.mxu0 0.0
        %1016 = vmatpush.xpose.msra.mxu0 %v999
        %1017 = vmatmul.f32.gmra.mxu0 %v996
        %v1018 = vpop.f32.mrf.mxu0
        %v1019 = vadd.f32 0.0, %v1018
        %1020 = vdwg.mxu0
        %v1022 = vsel %vm660, %v927, 0
        %v1025 = vsel %vm660, %v802, 0
        %1027 = vmatpush.xpose.msra.mxu0 0.0
        %1028 = vmatpush.xpose.msra.mxu0 0.0
        %1029 = vmatpush.xpose.msra.mxu0 0.0
        %1030 = vmatpush.xpose.msra.mxu0 0.0
        %1031 = vmatpush.xpose.msra.mxu0 0.0
        %1032 = vmatpush.xpose.msra.mxu0 0.0
        %1033 = vmatpush.xpose.msra.mxu0 0.0
        %1034 = vmatpush.xpose.msra.mxu0 0.0
        %1035 = vmatpush.xpose.msra.mxu0 0.0
        %1036 = vmatpush.xpose.msra.mxu0 0.0
        %1037 = vmatpush.xpose.msra.mxu0 0.0
        %1038 = vmatpush.xpose.msra.mxu0 0.0
        %1039 = vmatpush.xpose.msra.mxu0 0.0
        %1040 = vmatpush.xpose.msra.mxu0 0.0
        %1041 = vmatpush.xpose.msra.mxu0 0.0
        %1042 = vmatpush.xpose.msra.mxu0 %v1025
        %1043 = vmatmul.f32.gmra.mxu0 %v1022
        %v1044 = vpop.f32.mrf.mxu0
        %v1045 = vadd.f32 0.0, %v1044
        %1046 = vdwg.mxu0
        %1047 = vxpose.xlu0.b32.start [1/16] %v967, 128
        %1048 = vxpose.xlu0.b32.cont [2/16] 0.0, 128
        %1049 = vxpose.xlu0.b32.cont [3/16] 0.0, 128
        %1050 = vxpose.xlu0.b32.cont [4/16] 0.0, 128
        %1051 = vxpose.xlu0.b32.cont [5/16] 0.0, 128
        %1052 = vxpose.xlu0.b32.cont [6/16] 0.0, 128
        %1053 = vxpose.xlu0.b32.cont [7/16] 0.0, 128
        %1054 = vxpose.xlu0.b32.cont [8/16] 0.0, 128
        %1055 = vxpose.xlu0.b32.cont [9/16] 0.0, 128
        %1056 = vxpose.xlu0.b32.cont [10/16] 0.0, 128
        %1057 = vxpose.xlu0.b32.cont [11/16] 0.0, 128
        %1058 = vxpose.xlu0.b32.cont [12/16] 0.0, 128
        %1059 = vxpose.xlu0.b32.cont [13/16] 0.0, 128
        %1060 = vxpose.xlu0.b32.cont [14/16] 0.0, 128
        %1061 = vxpose.xlu0.b32.cont [15/16] 0.0, 128
        %1062 = vxpose.xlu0.b32.end [16/16] 0.0, 128
        %v1063 = vpop.trf.xlu0
        %v1064 = vpop.trf.xlu0
        %v1065 = vpop.trf.xlu0
        %v1066 = vpop.trf.xlu0
        %v1067 = vpop.trf.xlu0
        %v1068 = vpop.trf.xlu0
        %v1069 = vpop.trf.xlu0
        %v1070 = vpop.trf.xlu0
        %v1071 = vpop.trf.xlu0
        %v1072 = vpop.trf.xlu0
        %v1073 = vpop.trf.xlu0
        %v1074 = vpop.trf.xlu0
        %v1075 = vpop.trf.xlu0
        %v1076 = vpop.trf.xlu0
        %v1077 = vpop.trf.xlu0
        %v1078 = vpop.trf.xlu0
        %1079 = vxpose.xlu0.b32.start [1/16] %v993, 128
        %1080 = vxpose.xlu0.b32.cont [2/16] 0.0, 128
        %1081 = vxpose.xlu0.b32.cont [3/16] 0.0, 128
        %1082 = vxpose.xlu0.b32.cont [4/16] 0.0, 128
        %1083 = vxpose.xlu0.b32.cont [5/16] 0.0, 128
        %1084 = vxpose.xlu0.b32.cont [6/16] 0.0, 128
        %1085 = vxpose.xlu0.b32.cont [7/16] 0.0, 128
        %1086 = vxpose.xlu0.b32.cont [8/16] 0.0, 128
        %1087 = vxpose.xlu0.b32.cont [9/16] 0.0, 128
        %1088 = vxpose.xlu0.b32.cont [10/16] 0.0, 128
        %1089 = vxpose.xlu0.b32.cont [11/16] 0.0, 128
        %1090 = vxpose.xlu0.b32.cont [12/16] 0.0, 128
        %1091 = vxpose.xlu0.b32.cont [13/16] 0.0, 128
        %1092 = vxpose.xlu0.b32.cont [14/16] 0.0, 128
        %1093 = vxpose.xlu0.b32.cont [15/16] 0.0, 128
        %1094 = vxpose.xlu0.b32.end [16/16] 0.0, 128
        %v1095 = vpop.trf.xlu0
        %v1096 = vpop.trf.xlu0
        %v1097 = vpop.trf.xlu0
        %v1098 = vpop.trf.xlu0
        %v1099 = vpop.trf.xlu0
        %v1100 = vpop.trf.xlu0
        %v1101 = vpop.trf.xlu0
        %v1102 = vpop.trf.xlu0
        %v1103 = vpop.trf.xlu0
        %v1104 = vpop.trf.xlu0
        %v1105 = vpop.trf.xlu0
        %v1106 = vpop.trf.xlu0
        %v1107 = vpop.trf.xlu0
        %v1108 = vpop.trf.xlu0
        %v1109 = vpop.trf.xlu0
        %v1110 = vpop.trf.xlu0
        %1111 = vxpose.xlu0.b32.start [1/16] %v1019, 128
        %1112 = vxpose.xlu0.b32.cont [2/16] 0.0, 128
        %1113 = vxpose.xlu0.b32.cont [3/16] 0.0, 128
        %1114 = vxpose.xlu0.b32.cont [4/16] 0.0, 128
        %1115 = vxpose.xlu0.b32.cont [5/16] 0.0, 128
        %1116 = vxpose.xlu0.b32.cont [6/16] 0.0, 128
        %1117 = vxpose.xlu0.b32.cont [7/16] 0.0, 128
        %1118 = vxpose.xlu0.b32.cont [8/16] 0.0, 128
        %1119 = vxpose.xlu0.b32.cont [9/16] 0.0, 128
        %1120 = vxpose.xlu0.b32.cont [10/16] 0.0, 128
        %1121 = vxpose.xlu0.b32.cont [11/16] 0.0, 128
        %1122 = vxpose.xlu0.b32.cont [12/16] 0.0, 128
        %1123 = vxpose.xlu0.b32.cont [13/16] 0.0, 128
        %1124 = vxpose.xlu0.b32.cont [14/16] 0.0, 128
        %1125 = vxpose.xlu0.b32.cont [15/16] 0.0, 128
        %1126 = vxpose.xlu0.b32.end [16/16] 0.0, 128
        %v1127 = vpop.trf.xlu0
        %v1128 = vpop.trf.xlu0
        %v1129 = vpop.trf.xlu0
        %v1130 = vpop.trf.xlu0
        %v1131 = vpop.trf.xlu0
        %v1132 = vpop.trf.xlu0
        %v1133 = vpop.trf.xlu0
        %v1134 = vpop.trf.xlu0
        %v1135 = vpop.trf.xlu0
        %v1136 = vpop.trf.xlu0
        %v1137 = vpop.trf.xlu0
        %v1138 = vpop.trf.xlu0
        %v1139 = vpop.trf.xlu0
        %v1140 = vpop.trf.xlu0
        %v1141 = vpop.trf.xlu0
        %v1142 = vpop.trf.xlu0
        %1143 = vxpose.xlu0.b32.start [1/16] %v1045, 128
        %1144 = vxpose.xlu0.b32.cont [2/16] 0.0, 128
        %1145 = vxpose.xlu0.b32.cont [3/16] 0.0, 128
        %1146 = vxpose.xlu0.b32.cont [4/16] 0.0, 128
        %1147 = vxpose.xlu0.b32.cont [5/16] 0.0, 128
        %1148 = vxpose.xlu0.b32.cont [6/16] 0.0, 128
        %1149 = vxpose.xlu0.b32.cont [7/16] 0.0, 128
        %1150 = vxpose.xlu0.b32.cont [8/16] 0.0, 128
        %1151 = vxpose.xlu0.b32.cont [9/16] 0.0, 128
        %1152 = vxpose.xlu0.b32.cont [10/16] 0.0, 128
        %1153 = vxpose.xlu0.b32.cont [11/16] 0.0, 128
        %1154 = vxpose.xlu0.b32.cont [12/16] 0.0, 128
        %1155 = vxpose.xlu0.b32.cont [13/16] 0.0, 128
        %1156 = vxpose.xlu0.b32.cont [14/16] 0.0, 128
        %1157 = vxpose.xlu0.b32.cont [15/16] 0.0, 128
        %1158 = vxpose.xlu0.b32.end [16/16] 0.0, 128
        %v1159 = vpop.trf.xlu0
        %v1160 = vpop.trf.xlu0
        %v1161 = vpop.trf.xlu0
        %v1162 = vpop.trf.xlu0
        %v1163 = vpop.trf.xlu0
        %v1164 = vpop.trf.xlu0
        %v1165 = vpop.trf.xlu0
        %v1166 = vpop.trf.xlu0
        %v1167 = vpop.trf.xlu0
        %v1168 = vpop.trf.xlu0
        %v1169 = vpop.trf.xlu0
        %v1170 = vpop.trf.xlu0
        %v1171 = vpop.trf.xlu0
        %v1172 = vpop.trf.xlu0
        %v1173 = vpop.trf.xlu0
        %v1174 = vpop.trf.xlu0
        %v1175 = vrot.slane %v1127, 4
        %vm1176 = vcmask 1047556
        %v1177 = vsel %vm1176, %v1175, %v1063
        %v1178 = vrot.slane %v1063, 4
        %v1179 = vsel %vm1176, %v1127, %v1178
        %v1181 = vunpack.c.l.s4 1983009808
        %v1182 = vunpack.c.0.s8 %v1181
        %v1183 = vperm.slane %v1177, %v1182
        %v1185 = vunpack.c.l.s4 1983009808
        %v1186 = vunpack.c.0.s8 %v1185
        %v1187 = vperm.slane %v1179, %v1186
        %v1188 = vrot.slane %v1159, 4
        %v1189 = vsel %vm1176, %v1188, %v1095
        %v1190 = vrot.slane %v1095, 4
        %v1191 = vsel %vm1176, %v1159, %v1190
        %v1193 = vunpack.c.l.s4 1983009808
        %v1194 = vunpack.c.0.s8 %v1193
        %v1195 = vperm.slane %v1189, %v1194
        %v1197 = vunpack.c.l.s4 1983009808
        %v1198 = vunpack.c.0.s8 %v1197
        %v1199 = vperm.slane %v1191, %v1198
        %v1200 = vrot.slane %v1195, 4
        %v1201 = vsel %vm1176, %v1200, %v1183
        %v1202 = vrot.slane %v1183, 4
        %v1203 = vsel %vm1176, %v1195, %v1202
        %v1205 = vunpack.c.l.s4 1934713408
        %v1206 = vunpack.c.0.s8 %v1205
        %v1207 = vperm.slane %v1201, %v1206
        %v1209 = vunpack.c.l.s4 1934713408
        %v1210 = vunpack.c.0.s8 %v1209
        %v1211 = vperm.slane %v1203, %v1210
        %v1212 = vrot.slane %v1199, 4
        %v1213 = vsel %vm1176, %v1212, %v1187
        %v1214 = vrot.slane %v1187, 4
        %v1215 = vsel %vm1176, %v1199, %v1214
        %v1217 = vunpack.c.l.s4 1934713408
        %v1218 = vunpack.c.0.s8 %v1217
        %v1219 = vperm.slane %v1213, %v1218
        %v1221 = vunpack.c.l.s4 1934713408
        %v1222 = vunpack.c.0.s8 %v1221
        %v1223 = vperm.slane %v1215, %v1222
        %v1224 = vrot.slane %v1207, 4
        %v1225 = vsel %vm1176, 0.0, %v1224
        %v1226 = vrot.slane %v1211, 4
        %v1227 = vsel %vm1176, 0.0, %v1226
        %v1228 = vrot.slane %v1219, 4
        %v1229 = vsel %vm1176, 0.0, %v1228
        %v1230 = vrot.slane %v1223, 4
        %v1231 = vsel %vm1176, 0.0, %v1230
        %v1232 = vsel %vm1176, %v1226, %v1207
        %v1234 = vunpack.c.l.s4 1983009808
        %v1235 = vunpack.c.0.s8 %v1234
        %v1236 = vperm.slane %v1232, %v1235
        %v1237 = vrot.slane %v1227, 4
        %v1238 = vsel %vm1176, %v1237, %v1225
        %v1240 = vunpack.c.l.s4 1983009808
        %v1241 = vunpack.c.0.s8 %v1240
        %v1242 = vperm.slane %v1238, %v1241
        %v1243 = vsel %vm1176, %v1230, %v1219
        %v1245 = vunpack.c.l.s4 1983009808
        %v1246 = vunpack.c.0.s8 %v1245
        %v1247 = vperm.slane %v1243, %v1246
        %v1248 = vrot.slane %v1231, 4
        %v1249 = vsel %vm1176, %v1248, %v1229
        %v1251 = vunpack.c.l.s4 1983009808
        %v1252 = vunpack.c.0.s8 %v1251
        %v1253 = vperm.slane %v1249, %v1252
        %v1254 = vrot.slane %v1242, 4
        %v1255 = vsel %vm1176, %v1254, %v1236
        %v1256 = vrot.slane %v1236, 4
        %v1257 = vsel %vm1176, %v1242, %v1256
        %v1259 = vunpack.c.l.s4 1934713408
        %v1260 = vunpack.c.0.s8 %v1259
        %v1261 = vperm.slane %v1255, %v1260
        %v1263 = vunpack.c.l.s4 1934713408
        %v1264 = vunpack.c.0.s8 %v1263
        %v1265 = vperm.slane %v1257, %v1264
        %v1266 = vrot.slane %v1253, 4
        %v1267 = vsel %vm1176, %v1266, %v1247
        %v1268 = vrot.slane %v1247, 4
        %v1269 = vsel %vm1176, %v1253, %v1268
        %v1271 = vunpack.c.l.s4 1934713408
        %v1272 = vunpack.c.0.s8 %v1271
        %v1273 = vperm.slane %v1267, %v1272
        %v1275 = vunpack.c.l.s4 1934713408
        %v1276 = vunpack.c.0.s8 %v1275
        %v1277 = vperm.slane %v1269, %v1276
        %v1278 = vrot.slane %v1273, 4
        %v1279 = vsel %vm1176, %v1278, %v1261
        %v1280 = vrot.slane %v1261, 4
        %v1281 = vsel %vm1176, %v1273, %v1280
        %v1282 = vrot.slane %v1277, 4
        %v1283 = vsel %vm1176, %v1282, %v1265
        %v1284 = vrot.slane %v1265, 4
        %v1285 = vsel %vm1176, %v1277, %v1284
        %1287 = vrot.lane.b32.xlu0 %v1281, 8
        %v1288 = vpop.permute.xlu0 %1287
        %1291 = vrot.lane.b32.xlu0 %v1283, 16
        %v1292 = vpop.permute.xlu0 %1291
        %1295 = vrot.lane.b32.xlu0 %v1285, 24
        %v1296 = vpop.permute.xlu0 %1295
        %v1298 = vsel %vm660, %v1279, %v1288
        %vm1299 = vcmask 130048
        %v1300 = vsel %vm1299, %v1298, %v1292
        %vm1301 = vcmask 195584
        %v1302 = vsel %vm1301, %v1300, %v1296
        %v1303 = vld [vmem:[%s5] sm:$0xff]
        %v1304 = vld [vmem:[%s5 + $0x8] sm:$0xff]
        %v1305 = vld [vmem:[%s5 + $0x10] sm:$0xff]
        %v1306 = vld [vmem:[%s5 + $0x18] sm:$0xff]
        %v1307 = vld [vmem:[%s6] sm:$0x1]
        %v1309 = vperm.slane %v1307, 0
        %v1312 = vsel %vm439, %v1302, 0
        %1314 = vmatpush.msra.mxu0 0.0
        %1315 = vmatpush.msra.mxu0 0.0
        %1316 = vmatpush.msra.mxu0 0.0
        %1317 = vmatpush.msra.mxu0 0.0
        %1318 = vmatpush.msra.mxu0 0.0
        %1319 = vmatpush.msra.mxu0 0.0
        %1320 = vmatpush.msra.mxu0 0.0
        %1321 = vmatpush.msra.mxu0 0.0
        %1322 = vmatpush.msra.mxu0 0.0
        %1323 = vmatpush.msra.mxu0 0.0
        %1324 = vmatpush.msra.mxu0 0.0
        %1325 = vmatpush.msra.mxu0 0.0
        %1326 = vmatpush.msra.mxu0 %v1306
        %1327 = vmatpush.msra.mxu0 %v1305
        %1328 = vmatpush.msra.mxu0 %v1304
        %1329 = vmatpush.msra.mxu0 %v1303
        %1330 = vmatmul.f32.gmra.mxu0 %v1312
        %v1331 = vpop.f32.mrf.mxu0
        %v1332 = vadd.f32 %v1309, %v1331
        %1333 = vdwg.mxu0
        %v1334 = vadd.f32 %v436, %v1332
        %v1335 = vld [vmem:[%s7] sm:$0x1]
        %v1336 = vld [vmem:[%s8] sm:$0x1]
        %v1337 = vsel %vm439, %v1334, 0.0
        %1338 = vadd.xlane.f32.xlu0 %v1337
        %v1339 = vpop.xlane.xlu0 %1338
        %v1340 = vmul.f32 %v1339, %v449
        %v1341 = vsub.f32 %v1334, %v1340
        %v1342 = vmul.f32 %v1341, %v1341
        %v1343 = vsel %vm439, %v1342, 0.0
        %1344 = vadd.xlane.f32.xlu0 %v1343
        %v1345 = vpop.xlane.xlu0 %1344
        %v1346 = vmul.f32 %v1345, %v449
        %v1347 = vadd.f32 %v1346, 1e-05
        %v1348 = vrsqrt.pop %v1347
        %v1349 = vmul.f32 %v1348, %v1347
        %v1350 = vmul.f32 %v1349, %v1348
        %v1351 = vmul.f32 0.5, %v1350
        %v1352 = vsub.f32 1.5, %v1351
        %v1353 = vmul.f32 %v1348, %v1352
        %vm1354 = vweird.f32 %v1347
        %vm1355 = vweird.f32 %v1348
        %vm1356 = vmor %vm1354, %vm1355
        %v1357 = vsel %vm1356, %v1348, %v1353
        %v1358 = vmul.f32 %v1341, %v1357
        %v1360 = vperm.slane %v1335, 0
        %v1362 = vmul.f32 %v1358, %v1360
        %v1364 = vperm.slane %v1336, 0
        %v1366 = vadd.f32 %v1362, %v1364
        %v1367 = vld [vmem:[%s9] sm:$0xff]
        %v1368 = vld [vmem:[%s9 + $0x8] sm:$0xff]
        %v1369 = vld [vmem:[%s9 + $0x10] sm:$0xff]
        %v1370 = vld [vmem:[%s9 + $0x18] sm:$0xff]
        %v1371 = vld [vmem:[%s10] sm:$0x1]
        %v1373 = vperm.slane %v1371, 0
        %v1376 = vsel %vm439, %v1366, 0
        %1378 = vmatpush.msra.mxu0 0.0
        %1379 = vmatpush.msra.mxu0 0.0
        %1380 = vmatpush.msra.mxu0 0.0
        %1381 = vmatpush.msra.mxu0 0.0
        %1382 = vmatpush.msra.mxu0 0.0
        %1383 = vmatpush.msra.mxu0 0.0
        %1384 = vmatpush.msra.mxu0 0.0
        %1385 = vmatpush.msra.mxu0 0.0
        %1386 = vmatpush.msra.mxu0 0.0
        %1387 = vmatpush.msra.mxu0 0.0
        %1388 = vmatpush.msra.mxu0 0.0
        %1389 = vmatpush.msra.mxu0 0.0
        %1390 = vmatpush.msra.mxu0 %v1370
        %1391 = vmatpush.msra.mxu0 %v1369
        %1392 = vmatpush.msra.mxu0 %v1368
        %1393 = vmatpush.msra.mxu0 %v1367
        %1394 = vmatmul.f32.gmra.mxu0 %v1376
        %v1395 = vpop.f32.mrf.mxu0
        %v1396 = vadd.f32 %v1373, %v1395
        %1397 = vdwg.mxu0
        %v1398 = vmul.f32 %v1396, 0.5
        %v1399 = vmul.f32 %v1396, 0.044715
        %v1400 = vmul.f32 %v1399, %v1396
        %v1401 = vmul.f32 %v1400, %v1396
        %v1402 = vadd.f32 %v1396, %v1401
        %v1403 = vmul.f32 %v1402, 0.7978845
        %v1404 = vtanh.pop %v1403
        %v1405 = vadd.f32 %v1404, 1.0
        %v1406 = vmul.f32 %v1398, %v1405
        %v1407 = vld [vmem:[%s11] sm:$0xff]
        %v1408 = vld [vmem:[%s11 + $0x8] sm:$0xff]
        %v1409 = vld [vmem:[%s11 + $0x10] sm:$0xff]
        %v1410 = vld [vmem:[%s11 + $0x18] sm:$0xff]
        %v1411 = vld [vmem:[%s11 + $0x20] sm:$0xff]
        %v1412 = vld [vmem:[%s11 + $0x28] sm:$0xff]
        %v1413 = vld [vmem:[%s11 + $0x30] sm:$0xff]
        %v1414 = vld [vmem:[%s11 + $0x38] sm:$0xff]
        %v1415 = vld [vmem:[%s11 + $0x40] sm:$0xff]
        %v1416 = vld [vmem:[%s11 + $0x48] sm:$0xff]
        %v1417 = vld [vmem:[%s11 + $0x50] sm:$0xff]
        %v1418 = vld [vmem:[%s11 + $0x58] sm:$0xff]
        %v1419 = vld [vmem:[%s11 + $0x60] sm:$0xff]
        %v1420 = vld [vmem:[%s11 + $0x68] sm:$0xff]
        %v1421 = vld [vmem:[%s11 + $0x70] sm:$0xff]
        %v1422 = vld [vmem:[%s11 + $0x78] sm:$0xff]
        %v1423 = vld [vmem:[%s12] sm:$0x1]
        %v1425 = vperm.slane %v1423, 0
        %1427 = vmatpush.msra.mxu0 %v1422
        %1428 = vmatpush.msra.mxu0 %v1421
        %1429 = vmatpush.msra.mxu0 %v1420
        %1430 = vmatpush.msra.mxu0 %v1419
        %1431 = vmatpush.msra.mxu0 %v1418
        %1432 = vmatpush.msra.mxu0 %v1417
        %1433 = vmatpush.msra.mxu0 %v1416
        %1434 = vmatpush.msra.mxu0 %v1415
        %1435 = vmatpush.msra.mxu0 %v1414
        %1436 = vmatpush.msra.mxu0 %v1413
        %1437 = vmatpush.msra.mxu0 %v1412
        %1438 = vmatpush.msra.mxu0 %v1411
        %1439 = vmatpush.msra.mxu0 %v1410
        %1440 = vmatpush.msra.mxu0 %v1409
        %1441 = vmatpush.msra.mxu0 %v1408
        %1442 = vmatpush.msra.mxu0 %v1407
        %1443 = vmatmul.f32.gmra.mxu0 %v1406
        %v1444 = vpop.f32.mrf.mxu0
        %v1445 = vadd.f32 %v1425, %v1444
        %1446 = vdwg.mxu0
        %v1447 = vadd.f32 %v1334, %v1445
        %1448 = vst.msk [vmem:[%s431] sm:$0xff] %vm439, %v1447
        %s1449 = sand.u32 %s313, 1
        %s1450 = scalar_lea.sflag [#allocation3], %s1449
        %s1451 = sand.u32 %s313, 1
        %s1452 = smul.addr %s1451, 8
        %s1453 = scalar_lea.vmem [#allocation2], %s1452
        // Predicated region
        $region73: #{tpu_custom_call.1} parent=71 // pred_check
          %p1454 = pneg %p323
        $region74: #{tpu_custom_call.1} parent=71 // pred_check_branch
          %1456 = sbr.rel (%p1454) target = $region76
        $region75: #{tpu_custom_call.1} parent=71 // pred_region
          %1458 = vsyncadd %s1450, 0
          %s1459 = smul.addr %s27, 8
          %s1460 = scalar_lea.hbm %s13, %s1459
          %s1462 = sshll.u32 %s1453, 4
          %s1463 = int_to_ptr.vmem [resolvable:$true] %s1462
          %s1464 = sshll.u32 %s1460, 4
          %s1465 = int_to_ptr.hbm [resolvable:$true] %s1464
          %1467 = dma.vmem_to_hbm [thread:$0]  %s1463, 128, %s1465, %s1450
        $region76: #{tpu_custom_call.1} parent=71 // pred_fallthru
          _
      $region72: #{tpu_custom_call.1} parent=5 // pred_fallthru
        _
      %p1468 = scmp.le.s32.totalorder 2, %s22
      // Predicated region
      $region77: #{tpu_custom_call.1} parent=5 // pred_check
        %p1469 = pneg %p1468
      $region78: #{tpu_custom_call.1} parent=5 // pred_check_branch
        %1471 = sbr.rel (%p1469) target = $region80
      $region79: #{tpu_custom_call.1} parent=5 // pred_region
        %s1472 = ssub.s32 %s22, 2
        // Predicated region
        $region81: #{tpu_custom_call.1} parent=79 // pred_check
          %p1473 = pneg %p329
        $region82: #{tpu_custom_call.1} parent=79 // pred_check_branch
          %1475 = sbr.rel (%p1473) target = $region84
        $region83: #{tpu_custom_call.1} parent=79 // pred_region
          %s1476 = sand.u32 %s314, 1
          %s1477 = scalar_lea.sflag [#allocation3], %s1476
          %s1478 = sand.u32 %s314, 1
          %s1479 = smul.addr %s1478, 8
          %s1480 = scalar_lea.vmem [#allocation2], %s1479
          %1482 = dma.done %s1477, 128
        $region84: #{tpu_custom_call.1} parent=79 // pred_fallthru
          _
      $region80: #{tpu_custom_call.1} parent=5 // pred_fallthru
        _
    $region6: #{tpu_custom_call.1} parent=1 // loop_footer
      %s26 = sadd.s32 1, %s22
    $region7: #{tpu_custom_call.1} parent=1 // loop_footer_branch
      %21 = sbr.rel target = $region3
    $region8: #{tpu_custom_call.1} parent=1 // loop_exit
      _
    %1483 = vsyncpa [#allocation3], 1
    %s1484 = scalar_lea.sflag [#allocation3], 1
    %1485 = vsyncpa %s1484, 1

</llo_original>
